<compile_context>
chip_gen: v7x
topology: tpu7x:2x2x1
jax: 0.10.0
libtpu: 0.0.40
codegen_flags: <defaults>
</compile_context>

<pallas_src>
import functools

import numpy as np
import jax
import jax.numpy as jnp
from jax.experimental import pallas as pl
from jax.experimental.pallas import tpu as pltpu


# ----------------------------------------------------------------------------
# Glue: per-camera rotation matrix (same math as rotation_tensor, b=1, squeezed)
# ----------------------------------------------------------------------------
def rotation_matrix(r):
    theta, phi, psi = r[0], r[1], r[2]
    ct, st = jnp.cos(theta), jnp.sin(theta)
    cp, sp = jnp.cos(phi), jnp.sin(phi)
    cs, ss = jnp.cos(psi), jnp.sin(psi)
    one = jnp.float32(1.0)
    zero = jnp.float32(0.0)
    rot_x = jnp.stack([jnp.stack([one, zero, zero]),
                       jnp.stack([zero, ct, st]),
                       jnp.stack([zero, -st, ct])])
    rot_y = jnp.stack([jnp.stack([cp, zero, -sp]),
                       jnp.stack([zero, one, zero]),
                       jnp.stack([sp, zero, cp])])
    rot_z = jnp.stack([jnp.stack([cs, -ss, zero]),
                       jnp.stack([ss, cs, zero]),
                       jnp.stack([zero, zero, one])])
    return rot_z @ rot_y @ rot_x


# ----------------------------------------------------------------------------
# Pallas kernel: one (batch, output-pixel-chunk) pair per grid step;
# all cameras handled inside the step (single fused MXU dot across cameras).
# ----------------------------------------------------------------------------
def _camera_proj_kernel(rot_ref, trans_ref, cmat_ref, cpar_ref,
                        pt_ref, fts_ref, out_ref, *, H, W, NC, Cf, mxu_is_w):
    b = pl.program_id(0)
    chunk = out_ref.shape[-1]
    Md = W if mxu_is_w else H        # contracted on the MXU (the larger spatial dim)
    Vd = H if mxu_is_w else W        # contracted on the VPU (the smaller spatial dim)

    # ---- batch-only work, hoisted out of the camera loop --------------------
    pt0 = pt_ref[0, 0:1, :].astype(jnp.float32)      # (1, chunk)
    pt1 = pt_ref[0, 1:2, :].astype(jnp.float32)
    pt2 = pt_ref[0, 2:3, :].astype(jnp.float32)

    # pw[q] = sum_p pt[p] * rot[b, p, q] + trans[b, q]   ('bphw,bpq->bqhw' + trans)
    def world(q):
        return (pt0 * rot_ref[b * 9 + 0 * 3 + q]
                + pt1 * rot_ref[b * 9 + 1 * 3 + q]
                + pt2 * rot_ref[b * 9 + 2 * 3 + q]
                + trans_ref[b * 3 + q])

    pw0, pw1, pw2 = world(0), world(1), world(2)

    # In-kernel row/col indices (no HBM index arrays).
    m_iota = jax.lax.broadcasted_iota(jnp.int32, (Md, chunk), 0).astype(jnp.float32)
    v_iota = jax.lax.broadcasted_iota(jnp.int32, (Vd, chunk), 0).astype(jnp.float32)

    fts_mat = fts_ref[0].astype(jnp.float32)          # (Cf*Vd, Md)

    # ---- per-camera separable tent weights (NC is small & static) -----------
    wm_list = []   # weights along the MXU-contracted dim, each (Md, chunk)
    wv_list = []   # weights along the VPU-contracted dim, each (Vd, chunk)
    for cam in range(NC):
        # cam_pt[q] = sum_p pw[p] * cam_rot_mat[p, q]  (only q = 0, 1 are used)
        cx = (pw0 * cmat_ref[cam * 9 + 0]
              + pw1 * cmat_ref[cam * 9 + 3]
              + pw2 * cmat_ref[cam * 9 + 6])
        cy = (pw0 * cmat_ref[cam * 9 + 1]
              + pw1 * cmat_ref[cam * 9 + 4]
              + pw2 * cmat_ref[cam * 9 + 7])

        # projection + tanh -> normalized grid coords in (-1, 1)
        gx = jnp.tanh(cx * cpar_ref[cam * 4 + 0] + cpar_ref[cam * 4 + 2])   # (1, chunk)
        gy = jnp.tanh(cy * cpar_ref[cam * 4 + 1] + cpar_ref[cam * 4 + 3])   # (1, chunk)

        # grid_sample unnormalization (align_corners=False)
        ix = ((gx + 1.0) * W - 1.0) * 0.5     # column coordinate (input width W)
        iy = ((gy + 1.0) * H - 1.0) * 0.5     # row coordinate    (input height H)

        im, iv = (ix, iy) if mxu_is_w else (iy, ix)

        # Separable tent weights; zeros padding is implicit (weights vanish OOB).
        wm_list.append(jnp.maximum(0.0, 1.0 - jnp.abs(im - m_iota)))   # (Md, chunk)
        wv_list.append(jnp.maximum(0.0, 1.0 - jnp.abs(iv - v_iota)))   # (Vd, chunk)

    # ---- Stage 1 (MXU): ONE wide-N matmul for all cameras -------------------
    wm_all = jnp.concatenate(wm_list, axis=-1)                          # (Md, NC*chunk)
    u_all = jnp.dot(fts_mat, wm_all,
                    preferred_element_type=jnp.float32)                 # (Cf*Vd, NC*chunk)

    # ---- Stage 2 (VPU): contract the small dim, then ONE aligned store ------
    res_list = []
    for cam in range(NC):
        u_cam = u_all[:, cam * chunk:(cam + 1) * chunk].reshape(Cf, Vd, chunk)
        res_list.append(jnp.sum(u_cam * wv_list[cam][None, :, :], axis=1))   # (Cf, chunk)

    out_ref[0, :, :] = jnp.concatenate(res_list, axis=0).astype(out_ref.dtype)


# ----------------------------------------------------------------------------
# Wrapper
# ----------------------------------------------------------------------------
def _chunk_temp_bytes(c, NC, Cf, Md, Vd):
    # rough f32 per-chunk working set: tent weights + u_all + result slab + pw/iotas
    # + double-buffered pt / out blocks.
    return 4 * c * (NC * Md + NC * Cf * Vd + NC * Vd + NC * Cf + 16
                    + 2 * (3 + NC * Cf))


def _pick_chunk(P, NC, Cf, Md, Vd, budget_bytes=20 * 1024 * 1024):
    if P % 128 != 0:
        return P                       # tiny/odd spatial sizes: take the whole axis
    cands = [c for c in range(P, 0, -128) if P % c == 0]   # descending 128-multiples
    for c in cands:
        if _chunk_temp_bytes(c, NC, Cf, Md, Vd) <= budget_bytes:
            return c
    return cands[-1]                   # 128


def camera_projection_forward(x, rot, trans, cam_rot, cameras):
    """x: (B, C, H, W) NCHW, rot: (B,3,3), trans: (B,3,1,1),
    cam_rot: (NC,3), cameras: (NC,4). Returns (B, NC*(C-3), H, W)."""
    if isinstance(x, (list, tuple)):
        return jnp.concatenate(
            [camera_projection_forward(f, rot, trans, cam_rot, cameras) for f in x],
            axis=1)

    B, C, H, W = x.shape
    Cf = C - 3
    NC = cameras.shape[0]
    P = H * W

    # Contract the larger spatial dim on the MXU, the smaller on the VPU.
    mxu_is_w = W >= H
    if mxu_is_w:
        Md, Vd = W, H
        fts = x[:, :Cf].reshape(B, Cf * H, W)                       # native dtype
    else:
        Md, Vd = H, W
        fts = jnp.swapaxes(x[:, :Cf], 2, 3).reshape(B, Cf * W, H)   # native dtype

    pt = x[:, Cf:].reshape(B, 3, P)      # native dtype; cast to f32 inside the kernel

    chunk = _pick_chunk(P, NC, Cf, Md, Vd)
    n_chunks = P // chunk

    rot_flat = rot.reshape(B * 9).astype(jnp.float32)      # 1D SMEM (avoids 2D padding)
    trans_flat = trans.reshape(B * 3).astype(jnp.float32)
    cmats = jax.vmap(rotation_matrix)(cam_rot.astype(jnp.float32)).reshape(NC * 9)
    cpars = cameras.astype(jnp.float32).reshape(NC * 4)

    # Raise the scoped-VMEM limit if the working set exceeds the v5e default (16 MiB).
    est_vmem = (_chunk_temp_bytes(chunk, NC, Cf, Md, Vd)
                + 2 * x.dtype.itemsize * Cf * Vd * Md)      # double-buffered fts block
    vmem_limit = None
    if est_vmem > 12 * 1024 * 1024:
        vmem_limit = int(min(max(est_vmem * 3 // 2, 16 * 1024 * 1024),
                             48 * 1024 * 1024))

    out = pl.pallas_call(
        functools.partial(_camera_proj_kernel, H=H, W=W, NC=NC, Cf=Cf,
                          mxu_is_w=mxu_is_w),
        out_shape=jax.ShapeDtypeStruct((B, NC * Cf, P), jnp.float32),
        grid=(B, n_chunks),
        in_specs=[
            pl.BlockSpec(memory_space=pltpu.MemorySpace.SMEM),   # rot_flat   (B*9,)
            pl.BlockSpec(memory_space=pltpu.MemorySpace.SMEM),   # trans      (B*3,)
            pl.BlockSpec(memory_space=pltpu.MemorySpace.SMEM),   # cam mats   (NC*9,)
            pl.BlockSpec(memory_space=pltpu.MemorySpace.SMEM),   # cam params (NC*4,)
            pl.BlockSpec((1, 3, chunk), lambda b, pc: (b, 0, pc)),       # pt chunk
            pl.BlockSpec((1, Cf * Vd, Md), lambda b, pc: (b, 0, 0)),     # fts (full)
        ],
        out_specs=pl.BlockSpec((1, NC * Cf, chunk), lambda b, pc: (b, 0, pc)),
        compiler_params=pltpu.CompilerParams(
            dimension_semantics=("parallel", "parallel"),
            vmem_limit_bytes=vmem_limit),
    )(rot_flat, trans_flat, cmats, cpars, pt, fts)

    # views concatenated along channel dim, camera-major (matches torch.cat order)
    return out.reshape(B, NC * Cf, H, W)


# ----------------------------------------------------------------------------
# Pure-JAX reference (for correctness check)
# ----------------------------------------------------------------------------
def _ref_grid_sample(img, grid):
    # bilinear, padding_mode='zeros', align_corners=False (PyTorch defaults)
    B, C, H, W = img.shape
    gx, gy = grid[..., 0], grid[..., 1]
    ix = ((gx + 1.0) * W - 1.0) * 0.5
    iy = ((gy + 1.0) * H - 1.0) * 0.5
    x0, y0 = jnp.floor(ix), jnp.floor(iy)
    x1, y1 = x0 + 1.0, y0 + 1.0
    wx1, wy1 = ix - x0, iy - y0
    wx0, wy0 = 1.0 - wx1, 1.0 - wy1
    img_flat = img.reshape(B, C, H * W)

    def sample(xi, yi):
        valid = (xi >= 0) & (xi <= W - 1) & (yi >= 0) & (yi <= H - 1)
        xc = jnp.clip(xi, 0, W - 1).astype(jnp.int32)
        yc = jnp.clip(yi, 0, H - 1).astype(jnp.int32)
        lin = (yc * W + xc).reshape(B, -1)
        vals = jax.vmap(lambda im, ind: im[:, ind])(img_flat, lin)
        vals = vals.reshape(B, C, *xi.shape[1:])
        return vals * valid[:, None].astype(img.dtype)

    return (sample(x0, y0) * (wx0 * wy0)[:, None]
            + sample(x1, y0) * (wx1 * wy0)[:, None]
            + sample(x0, y1) * (wx0 * wy1)[:, None]
            + sample(x1, y1) * (wx1 * wy1)[:, None])


def _ref_forward(x, rot, trans, cam_rot, cameras):
    fts = x[:, :-3]
    pt = x[:, -3:]
    pw = jnp.einsum('bphw,bpq->bqhw', pt, rot) + trans
    views = []
    for i in range(cameras.shape[0]):
        rmat = rotation_matrix(cam_rot[i])
        cam_pt = jnp.einsum('bphw,pq->bqhw', pw, rmat)
        proj = jnp.stack([cam_pt[:, 0] * cameras[i, 0] + cameras[i, 2],
                          cam_pt[:, 1] * cameras[i, 1] + cameras[i, 3]], axis=-1)
        proj = jnp.tanh(proj)
        views.append(_ref_grid_sample(fts, proj))
    return jnp.concatenate(views, axis=1)


# ----------------------------------------------------------------------------
if __name__ == "__main__":
    key = jax.random.PRNGKey(0)
    kx, kr, kt, kc1, kc2 = jax.random.split(key, 5)

    B, C, H, W = 2, 7, 16, 16      # fts channels = 4, last 3 channels = 3D points
    NC = 3                         # num_cameras

    x = jax.random.normal(kx, (B, C, H, W), jnp.float32)
    rot = jax.random.normal(kr, (B, 3, 3), jnp.float32) * 0.5
    trans = jax.random.normal(kt, (B, 3, 1, 1), jnp.float32) * 0.1
    # deterministic "parameters" matching nn.Parameter init in __init__:
    cameras = jax.random.uniform(kc1, (NC, 4), jnp.float32) * 2.0 - 1.0   # rand(4)*2-1
    cam_rot = jax.random.uniform(kc2, (NC, 3), jnp.float32) * np.pi       # rand(3)*pi

    out = camera_projection_forward(x, rot, trans, cam_rot, cameras)
    out = jax.block_until_ready(out)

    assert out.shape == (B, NC * (C - 3), H, W)
    ref = _ref_forward(x, rot, trans, cam_rot, cameras)
    np.testing.assert_allclose(np.asarray(out), np.asarray(ref), rtol=1e-3, atol=1e-3)
    print("KERNEL_OK")
</pallas_src>

<mosaic_0001>
module attributes {stable_mosaic.version = 11 : i64} {
  func.func @_camera_proj_kernel(%arg0: i32, %arg1: i32, %arg2: memref<18xf32, #tpu.memory_space<smem>>, %arg3: memref<6xf32, #tpu.memory_space<smem>>, %arg4: memref<27xf32, #tpu.memory_space<smem>>, %arg5: memref<12xf32, #tpu.memory_space<smem>>, %arg6: memref<1x3x256xf32, #tpu.memory_space<vmem>>, %arg7: memref<1x64x16xf32, #tpu.memory_space<vmem>>, %arg8: memref<1x12x256xf32, #tpu.memory_space<vmem>>) attributes {dimension_semantics = [#tpu.dimension_semantics<parallel>, #tpu.dimension_semantics<parallel>], iteration_bounds = array<i64: 2, 1>, scalar_prefetch = 0 : i64, scratch_operands = 0 : i64, tpu.core_type = #tpu.core_type<tc>, window_params = [{transform_indices = @transform_0, window_bounds = array<i64: 18>}, {transform_indices = @transform_1, window_bounds = array<i64: 6>}, {transform_indices = @transform_2, window_bounds = array<i64: 27>}, {transform_indices = @transform_3, window_bounds = array<i64: 12>}, {transform_indices = @transform_4, window_bounds = array<i64: 1, 3, 256>}, {transform_indices = @transform_5, window_bounds = array<i64: 1, 64, 16>}, {transform_indices = @transform_6, window_bounds = array<i64: 1, 12, 256>}]} {
    %c0 = arith.constant 0 : index
    %c0_0 = arith.constant 0 : index
    %c0_1 = arith.constant 0 : index
    %0 = vector.load %arg6[%c0, %c0_0, %c0_1] : memref<1x3x256xf32, #tpu.memory_space<vmem>>, vector<1x1x256xf32>
    %1 = vector.shape_cast %0 : vector<1x1x256xf32> to vector<1x256xf32>
    %c0_2 = arith.constant 0 : index
    %c1 = arith.constant 1 : index
    %c0_3 = arith.constant 0 : index
    %2 = vector.load %arg6[%c0_2, %c1, %c0_3] : memref<1x3x256xf32, #tpu.memory_space<vmem>>, vector<1x1x256xf32>
    %3 = vector.shape_cast %2 : vector<1x1x256xf32> to vector<1x256xf32>
    %c0_4 = arith.constant 0 : index
    %c2 = arith.constant 2 : index
    %c0_5 = arith.constant 0 : index
    %4 = vector.load %arg6[%c0_4, %c2, %c0_5] : memref<1x3x256xf32, #tpu.memory_space<vmem>>, vector<1x1x256xf32>
    %5 = vector.shape_cast %4 : vector<1x1x256xf32> to vector<1x256xf32>
    %c9_i32 = arith.constant 9 : i32
    %6 = arith.muli %arg0, %c9_i32 : i32
    %c0_i32 = arith.constant 0 : i32
    %7 = arith.addi %6, %c0_i32 : i32
    %c0_i32_6 = arith.constant 0 : i32
    %8 = arith.addi %7, %c0_i32_6 : i32
    %9 = arith.index_cast %8 : i32 to index
    %10 = memref.load %arg2[%9] : memref<18xf32, #tpu.memory_space<smem>>
    %11 = vector.broadcast %10 : f32 to vector<1x256xf32>
    %12 = arith.mulf %1, %11 : vector<1x256xf32>
    %c9_i32_7 = arith.constant 9 : i32
    %13 = arith.muli %arg0, %c9_i32_7 : i32
    %c3_i32 = arith.constant 3 : i32
    %14 = arith.addi %13, %c3_i32 : i32
    %c0_i32_8 = arith.constant 0 : i32
    %15 = arith.addi %14, %c0_i32_8 : i32
    %16 = arith.index_cast %15 : i32 to index
    %17 = memref.load %arg2[%16] : memref<18xf32, #tpu.memory_space<smem>>
    %18 = vector.broadcast %17 : f32 to vector<1x256xf32>
    %19 = arith.mulf %3, %18 : vector<1x256xf32>
    %20 = arith.addf %12, %19 : vector<1x256xf32>
    %c9_i32_9 = arith.constant 9 : i32
    %21 = arith.muli %arg0, %c9_i32_9 : i32
    %c6_i32 = arith.constant 6 : i32
    %22 = arith.addi %21, %c6_i32 : i32
    %c0_i32_10 = arith.constant 0 : i32
    %23 = arith.addi %22, %c0_i32_10 : i32
    %24 = arith.index_cast %23 : i32 to index
    %25 = memref.load %arg2[%24] : memref<18xf32, #tpu.memory_space<smem>>
    %26 = vector.broadcast %25 : f32 to vector<1x256xf32>
    %27 = arith.mulf %5, %26 : vector<1x256xf32>
    %28 = arith.addf %20, %27 : vector<1x256xf32>
    %c3_i32_11 = arith.constant 3 : i32
    %29 = arith.muli %arg0, %c3_i32_11 : i32
    %c0_i32_12 = arith.constant 0 : i32
    %30 = arith.addi %29, %c0_i32_12 : i32
    %31 = arith.index_cast %30 : i32 to index
    %32 = memref.load %arg3[%31] : memref<6xf32, #tpu.memory_space<smem>>
    %33 = vector.broadcast %32 : f32 to vector<1x256xf32>
    %34 = arith.addf %28, %33 : vector<1x256xf32>
    %c9_i32_13 = arith.constant 9 : i32
    %35 = arith.muli %arg0, %c9_i32_13 : i32
    %c0_i32_14 = arith.constant 0 : i32
    %36 = arith.addi %35, %c0_i32_14 : i32
    %c1_i32 = arith.constant 1 : i32
    %37 = arith.addi %36, %c1_i32 : i32
    %38 = arith.index_cast %37 : i32 to index
    %39 = memref.load %arg2[%38] : memref<18xf32, #tpu.memory_space<smem>>
    %40 = vector.broadcast %39 : f32 to vector<1x256xf32>
    %41 = arith.mulf %1, %40 : vector<1x256xf32>
    %c9_i32_15 = arith.constant 9 : i32
    %42 = arith.muli %arg0, %c9_i32_15 : i32
    %c3_i32_16 = arith.constant 3 : i32
    %43 = arith.addi %42, %c3_i32_16 : i32
    %c1_i32_17 = arith.constant 1 : i32
    %44 = arith.addi %43, %c1_i32_17 : i32
    %45 = arith.index_cast %44 : i32 to index
    %46 = memref.load %arg2[%45] : memref<18xf32, #tpu.memory_space<smem>>
    %47 = vector.broadcast %46 : f32 to vector<1x256xf32>
    %48 = arith.mulf %3, %47 : vector<1x256xf32>
    %49 = arith.addf %41, %48 : vector<1x256xf32>
    %c9_i32_18 = arith.constant 9 : i32
    %50 = arith.muli %arg0, %c9_i32_18 : i32
    %c6_i32_19 = arith.constant 6 : i32
    %51 = arith.addi %50, %c6_i32_19 : i32
    %c1_i32_20 = arith.constant 1 : i32
    %52 = arith.addi %51, %c1_i32_20 : i32
    %53 = arith.index_cast %52 : i32 to index
    %54 = memref.load %arg2[%53] : memref<18xf32, #tpu.memory_space<smem>>
    %55 = vector.broadcast %54 : f32 to vector<1x256xf32>
    %56 = arith.mulf %5, %55 : vector<1x256xf32>
    %57 = arith.addf %49, %56 : vector<1x256xf32>
    %c3_i32_21 = arith.constant 3 : i32
    %58 = arith.muli %arg0, %c3_i32_21 : i32
    %c1_i32_22 = arith.constant 1 : i32
    %59 = arith.addi %58, %c1_i32_22 : i32
    %60 = arith.index_cast %59 : i32 to index
    %61 = memref.load %arg3[%60] : memref<6xf32, #tpu.memory_space<smem>>
    %62 = vector.broadcast %61 : f32 to vector<1x256xf32>
    %63 = arith.addf %57, %62 : vector<1x256xf32>
    %c9_i32_23 = arith.constant 9 : i32
    %64 = arith.muli %arg0, %c9_i32_23 : i32
    %c0_i32_24 = arith.constant 0 : i32
    %65 = arith.addi %64, %c0_i32_24 : i32
    %c2_i32 = arith.constant 2 : i32
    %66 = arith.addi %65, %c2_i32 : i32
    %67 = arith.index_cast %66 : i32 to index
    %68 = memref.load %arg2[%67] : memref<18xf32, #tpu.memory_space<smem>>
    %69 = vector.broadcast %68 : f32 to vector<1x256xf32>
    %70 = arith.mulf %1, %69 : vector<1x256xf32>
    %c9_i32_25 = arith.constant 9 : i32
    %71 = arith.muli %arg0, %c9_i32_25 : i32
    %c3_i32_26 = arith.constant 3 : i32
    %72 = arith.addi %71, %c3_i32_26 : i32
    %c2_i32_27 = arith.constant 2 : i32
    %73 = arith.addi %72, %c2_i32_27 : i32
    %74 = arith.index_cast %73 : i32 to index
    %75 = memref.load %arg2[%74] : memref<18xf32, #tpu.memory_space<smem>>
    %76 = vector.broadcast %75 : f32 to vector<1x256xf32>
    %77 = arith.mulf %3, %76 : vector<1x256xf32>
    %78 = arith.addf %70, %77 : vector<1x256xf32>
    %c9_i32_28 = arith.constant 9 : i32
    %79 = arith.muli %arg0, %c9_i32_28 : i32
    %c6_i32_29 = arith.constant 6 : i32
    %80 = arith.addi %79, %c6_i32_29 : i32
    %c2_i32_30 = arith.constant 2 : i32
    %81 = arith.addi %80, %c2_i32_30 : i32
    %82 = arith.index_cast %81 : i32 to index
    %83 = memref.load %arg2[%82] : memref<18xf32, #tpu.memory_space<smem>>
    %84 = vector.broadcast %83 : f32 to vector<1x256xf32>
    %85 = arith.mulf %5, %84 : vector<1x256xf32>
    %86 = arith.addf %78, %85 : vector<1x256xf32>
    %c3_i32_31 = arith.constant 3 : i32
    %87 = arith.muli %arg0, %c3_i32_31 : i32
    %c2_i32_32 = arith.constant 2 : i32
    %88 = arith.addi %87, %c2_i32_32 : i32
    %89 = arith.index_cast %88 : i32 to index
    %90 = memref.load %arg3[%89] : memref<6xf32, #tpu.memory_space<smem>>
    %91 = vector.broadcast %90 : f32 to vector<1x256xf32>
    %92 = arith.addf %86, %91 : vector<1x256xf32>
    %93 = tpu.iota {dimensions = array<i32: 0>} : vector<16x256xi32>
    %94 = arith.sitofp %93 : vector<16x256xi32> to vector<16x256xf32>
    %95 = tpu.iota {dimensions = array<i32: 0>} : vector<16x256xi32>
    %96 = arith.sitofp %95 : vector<16x256xi32> to vector<16x256xf32>
    %c0_33 = arith.constant 0 : index
    %c0_34 = arith.constant 0 : index
    %c0_35 = arith.constant 0 : index
    %97 = vector.load %arg7[%c0_33, %c0_34, %c0_35] : memref<1x64x16xf32, #tpu.memory_space<vmem>>, vector<1x64x16xf32>
    %98 = vector.shape_cast %97 : vector<1x64x16xf32> to vector<64x16xf32>
    %c0_36 = arith.constant 0 : index
    %99 = memref.load %arg4[%c0_36] : memref<27xf32, #tpu.memory_space<smem>>
    %100 = vector.broadcast %99 : f32 to vector<1x256xf32>
    %101 = arith.mulf %34, %100 : vector<1x256xf32>
    %c3 = arith.constant 3 : index
    %102 = memref.load %arg4[%c3] : memref<27xf32, #tpu.memory_space<smem>>
    %103 = vector.broadcast %102 : f32 to vector<1x256xf32>
    %104 = arith.mulf %63, %103 : vector<1x256xf32>
    %105 = arith.addf %101, %104 : vector<1x256xf32>
    %c6 = arith.constant 6 : index
    %106 = memref.load %arg4[%c6] : memref<27xf32, #tpu.memory_space<smem>>
    %107 = vector.broadcast %106 : f32 to vector<1x256xf32>
    %108 = arith.mulf %92, %107 : vector<1x256xf32>
    %109 = arith.addf %105, %108 : vector<1x256xf32>
    %c1_37 = arith.constant 1 : index
    %110 = memref.load %arg4[%c1_37] : memref<27xf32, #tpu.memory_space<smem>>
    %111 = vector.broadcast %110 : f32 to vector<1x256xf32>
    %112 = arith.mulf %34, %111 : vector<1x256xf32>
    %c4 = arith.constant 4 : index
    %113 = memref.load %arg4[%c4] : memref<27xf32, #tpu.memory_space<smem>>
    %114 = vector.broadcast %113 : f32 to vector<1x256xf32>
    %115 = arith.mulf %63, %114 : vector<1x256xf32>
    %116 = arith.addf %112, %115 : vector<1x256xf32>
    %c7 = arith.constant 7 : index
    %117 = memref.load %arg4[%c7] : memref<27xf32, #tpu.memory_space<smem>>
    %118 = vector.broadcast %117 : f32 to vector<1x256xf32>
    %119 = arith.mulf %92, %118 : vector<1x256xf32>
    %120 = arith.addf %116, %119 : vector<1x256xf32>
    %c0_38 = arith.constant 0 : index
    %121 = memref.load %arg5[%c0_38] : memref<12xf32, #tpu.memory_space<smem>>
    %122 = vector.broadcast %121 : f32 to vector<1x256xf32>
    %123 = arith.mulf %109, %122 : vector<1x256xf32>
    %c2_39 = arith.constant 2 : index
    %124 = memref.load %arg5[%c2_39] : memref<12xf32, #tpu.memory_space<smem>>
    %125 = vector.broadcast %124 : f32 to vector<1x256xf32>
    %126 = arith.addf %123, %125 : vector<1x256xf32>
    %127 = math.tanh %126 : vector<1x256xf32>
    %c1_40 = arith.constant 1 : index
    %128 = memref.load %arg5[%c1_40] : memref<12xf32, #tpu.memory_space<smem>>
    %129 = vector.broadcast %128 : f32 to vector<1x256xf32>
    %130 = arith.mulf %120, %129 : vector<1x256xf32>
    %c3_41 = arith.constant 3 : index
    %131 = memref.load %arg5[%c3_41] : memref<12xf32, #tpu.memory_space<smem>>
    %132 = vector.broadcast %131 : f32 to vector<1x256xf32>
    %133 = arith.addf %130, %132 : vector<1x256xf32>
    %134 = math.tanh %133 : vector<1x256xf32>
    %cst = arith.constant 1.000000e+00 : f32
    %135 = vector.broadcast %cst : f32 to vector<1x256xf32>
    %136 = arith.addf %127, %135 : vector<1x256xf32>
    %cst_42 = arith.constant 1.600000e+01 : f32
    %137 = vector.broadcast %cst_42 : f32 to vector<1x256xf32>
    %138 = arith.mulf %136, %137 : vector<1x256xf32>
    %cst_43 = arith.constant 1.000000e+00 : f32
    %139 = vector.broadcast %cst_43 : f32 to vector<1x256xf32>
    %140 = arith.subf %138, %139 : vector<1x256xf32>
    %cst_44 = arith.constant 5.000000e-01 : f32
    %141 = vector.broadcast %cst_44 : f32 to vector<1x256xf32>
    %142 = arith.mulf %140, %141 : vector<1x256xf32>
    %cst_45 = arith.constant 1.000000e+00 : f32
    %143 = vector.broadcast %cst_45 : f32 to vector<1x256xf32>
    %144 = arith.addf %134, %143 : vector<1x256xf32>
    %cst_46 = arith.constant 1.600000e+01 : f32
    %145 = vector.broadcast %cst_46 : f32 to vector<1x256xf32>
    %146 = arith.mulf %144, %145 : vector<1x256xf32>
    %cst_47 = arith.constant 1.000000e+00 : f32
    %147 = vector.broadcast %cst_47 : f32 to vector<1x256xf32>
    %148 = arith.subf %146, %147 : vector<1x256xf32>
    %cst_48 = arith.constant 5.000000e-01 : f32
    %149 = vector.broadcast %cst_48 : f32 to vector<1x256xf32>
    %150 = arith.mulf %148, %149 : vector<1x256xf32>
    %151 = vector.broadcast %142 : vector<1x256xf32> to vector<16x256xf32>
    %152 = arith.subf %151, %94 : vector<16x256xf32>
    %153 = math.absf %152 : vector<16x256xf32>
    %cst_49 = arith.constant 1.000000e+00 : f32
    %154 = vector.broadcast %cst_49 : f32 to vector<16x256xf32>
    %155 = arith.subf %154, %153 : vector<16x256xf32>
    %cst_50 = arith.constant 0.000000e+00 : f32
    %156 = vector.broadcast %cst_50 : f32 to vector<16x256xf32>
    %157 = arith.maximumf %156, %155 : vector<16x256xf32>
    %158 = vector.broadcast %150 : vector<1x256xf32> to vector<16x256xf32>
    %159 = arith.subf %158, %96 : vector<16x256xf32>
    %160 = math.absf %159 : vector<16x256xf32>
    %cst_51 = arith.constant 1.000000e+00 : f32
    %161 = vector.broadcast %cst_51 : f32 to vector<16x256xf32>
    %162 = arith.subf %161, %160 : vector<16x256xf32>
    %cst_52 = arith.constant 0.000000e+00 : f32
    %163 = vector.broadcast %cst_52 : f32 to vector<16x256xf32>
    %164 = arith.maximumf %163, %162 : vector<16x256xf32>
    %c9 = arith.constant 9 : index
    %165 = memref.load %arg4[%c9] : memref<27xf32, #tpu.memory_space<smem>>
    %166 = vector.broadcast %165 : f32 to vector<1x256xf32>
    %167 = arith.mulf %34, %166 : vector<1x256xf32>
    %c12 = arith.constant 12 : index
    %168 = memref.load %arg4[%c12] : memref<27xf32, #tpu.memory_space<smem>>
    %169 = vector.broadcast %168 : f32 to vector<1x256xf32>
    %170 = arith.mulf %63, %169 : vector<1x256xf32>
    %171 = arith.addf %167, %170 : vector<1x256xf32>
    %c15 = arith.constant 15 : index
    %172 = memref.load %arg4[%c15] : memref<27xf32, #tpu.memory_space<smem>>
    %173 = vector.broadcast %172 : f32 to vector<1x256xf32>
    %174 = arith.mulf %92, %173 : vector<1x256xf32>
    %175 = arith.addf %171, %174 : vector<1x256xf32>
    %c10 = arith.constant 10 : index
    %176 = memref.load %arg4[%c10] : memref<27xf32, #tpu.memory_space<smem>>
    %177 = vector.broadcast %176 : f32 to vector<1x256xf32>
    %178 = arith.mulf %34, %177 : vector<1x256xf32>
    %c13 = arith.constant 13 : index
    %179 = memref.load %arg4[%c13] : memref<27xf32, #tpu.memory_space<smem>>
    %180 = vector.broadcast %179 : f32 to vector<1x256xf32>
    %181 = arith.mulf %63, %180 : vector<1x256xf32>
    %182 = arith.addf %178, %181 : vector<1x256xf32>
    %c16 = arith.constant 16 : index
    %183 = memref.load %arg4[%c16] : memref<27xf32, #tpu.memory_space<smem>>
    %184 = vector.broadcast %183 : f32 to vector<1x256xf32>
    %185 = arith.mulf %92, %184 : vector<1x256xf32>
    %186 = arith.addf %182, %185 : vector<1x256xf32>
    %c4_53 = arith.constant 4 : index
    %187 = memref.load %arg5[%c4_53] : memref<12xf32, #tpu.memory_space<smem>>
    %188 = vector.broadcast %187 : f32 to vector<1x256xf32>
    %189 = arith.mulf %175, %188 : vector<1x256xf32>
    %c6_54 = arith.constant 6 : index
    %190 = memref.load %arg5[%c6_54] : memref<12xf32, #tpu.memory_space<smem>>
    %191 = vector.broadcast %190 : f32 to vector<1x256xf32>
    %192 = arith.addf %189, %191 : vector<1x256xf32>
    %193 = math.tanh %192 : vector<1x256xf32>
    %c5 = arith.constant 5 : index
    %194 = memref.load %arg5[%c5] : memref<12xf32, #tpu.memory_space<smem>>
    %195 = vector.broadcast %194 : f32 to vector<1x256xf32>
    %196 = arith.mulf %186, %195 : vector<1x256xf32>
    %c7_55 = arith.constant 7 : index
    %197 = memref.load %arg5[%c7_55] : memref<12xf32, #tpu.memory_space<smem>>
    %198 = vector.broadcast %197 : f32 to vector<1x256xf32>
    %199 = arith.addf %196, %198 : vector<1x256xf32>
    %200 = math.tanh %199 : vector<1x256xf32>
    %cst_56 = arith.constant 1.000000e+00 : f32
    %201 = vector.broadcast %cst_56 : f32 to vector<1x256xf32>
    %202 = arith.addf %193, %201 : vector<1x256xf32>
    %cst_57 = arith.constant 1.600000e+01 : f32
    %203 = vector.broadcast %cst_57 : f32 to vector<1x256xf32>
    %204 = arith.mulf %202, %203 : vector<1x256xf32>
    %cst_58 = arith.constant 1.000000e+00 : f32
    %205 = vector.broadcast %cst_58 : f32 to vector<1x256xf32>
    %206 = arith.subf %204, %205 : vector<1x256xf32>
    %cst_59 = arith.constant 5.000000e-01 : f32
    %207 = vector.broadcast %cst_59 : f32 to vector<1x256xf32>
    %208 = arith.mulf %206, %207 : vector<1x256xf32>
    %cst_60 = arith.constant 1.000000e+00 : f32
    %209 = vector.broadcast %cst_60 : f32 to vector<1x256xf32>
    %210 = arith.addf %200, %209 : vector<1x256xf32>
    %cst_61 = arith.constant 1.600000e+01 : f32
    %211 = vector.broadcast %cst_61 : f32 to vector<1x256xf32>
    %212 = arith.mulf %210, %211 : vector<1x256xf32>
    %cst_62 = arith.constant 1.000000e+00 : f32
    %213 = vector.broadcast %cst_62 : f32 to vector<1x256xf32>
    %214 = arith.subf %212, %213 : vector<1x256xf32>
    %cst_63 = arith.constant 5.000000e-01 : f32
    %215 = vector.broadcast %cst_63 : f32 to vector<1x256xf32>
    %216 = arith.mulf %214, %215 : vector<1x256xf32>
    %217 = vector.broadcast %208 : vector<1x256xf32> to vector<16x256xf32>
    %218 = arith.subf %217, %94 : vector<16x256xf32>
    %219 = math.absf %218 : vector<16x256xf32>
    %cst_64 = arith.constant 1.000000e+00 : f32
    %220 = vector.broadcast %cst_64 : f32 to vector<16x256xf32>
    %221 = arith.subf %220, %219 : vector<16x256xf32>
    %cst_65 = arith.constant 0.000000e+00 : f32
    %222 = vector.broadcast %cst_65 : f32 to vector<16x256xf32>
    %223 = arith.maximumf %222, %221 : vector<16x256xf32>
    %224 = vector.broadcast %216 : vector<1x256xf32> to vector<16x256xf32>
    %225 = arith.subf %224, %96 : vector<16x256xf32>
    %226 = math.absf %225 : vector<16x256xf32>
    %cst_66 = arith.constant 1.000000e+00 : f32
    %227 = vector.broadcast %cst_66 : f32 to vector<16x256xf32>
    %228 = arith.subf %227, %226 : vector<16x256xf32>
    %cst_67 = arith.constant 0.000000e+00 : f32
    %229 = vector.broadcast %cst_67 : f32 to vector<16x256xf32>
    %230 = arith.maximumf %229, %228 : vector<16x256xf32>
    %c18 = arith.constant 18 : index
    %231 = memref.load %arg4[%c18] : memref<27xf32, #tpu.memory_space<smem>>
    %232 = vector.broadcast %231 : f32 to vector<1x256xf32>
    %233 = arith.mulf %34, %232 : vector<1x256xf32>
    %c21 = arith.constant 21 : index
    %234 = memref.load %arg4[%c21] : memref<27xf32, #tpu.memory_space<smem>>
    %235 = vector.broadcast %234 : f32 to vector<1x256xf32>
    %236 = arith.mulf %63, %235 : vector<1x256xf32>
    %237 = arith.addf %233, %236 : vector<1x256xf32>
    %c24 = arith.constant 24 : index
    %238 = memref.load %arg4[%c24] : memref<27xf32, #tpu.memory_space<smem>>
    %239 = vector.broadcast %238 : f32 to vector<1x256xf32>
    %240 = arith.mulf %92, %239 : vector<1x256xf32>
    %241 = arith.addf %237, %240 : vector<1x256xf32>
    %c19 = arith.constant 19 : index
    %242 = memref.load %arg4[%c19] : memref<27xf32, #tpu.memory_space<smem>>
    %243 = vector.broadcast %242 : f32 to vector<1x256xf32>
    %244 = arith.mulf %34, %243 : vector<1x256xf32>
    %c22 = arith.constant 22 : index
    %245 = memref.load %arg4[%c22] : memref<27xf32, #tpu.memory_space<smem>>
    %246 = vector.broadcast %245 : f32 to vector<1x256xf32>
    %247 = arith.mulf %63, %246 : vector<1x256xf32>
    %248 = arith.addf %244, %247 : vector<1x256xf32>
    %c25 = arith.constant 25 : index
    %249 = memref.load %arg4[%c25] : memref<27xf32, #tpu.memory_space<smem>>
    %250 = vector.broadcast %249 : f32 to vector<1x256xf32>
    %251 = arith.mulf %92, %250 : vector<1x256xf32>
    %252 = arith.addf %248, %251 : vector<1x256xf32>
    %c8 = arith.constant 8 : index
    %253 = memref.load %arg5[%c8] : memref<12xf32, #tpu.memory_space<smem>>
    %254 = vector.broadcast %253 : f32 to vector<1x256xf32>
    %255 = arith.mulf %241, %254 : vector<1x256xf32>
    %c10_68 = arith.constant 10 : index
    %256 = memref.load %arg5[%c10_68] : memref<12xf32, #tpu.memory_space<smem>>
    %257 = vector.broadcast %256 : f32 to vector<1x256xf32>
    %258 = arith.addf %255, %257 : vector<1x256xf32>
    %259 = math.tanh %258 : vector<1x256xf32>
    %c9_69 = arith.constant 9 : index
    %260 = memref.load %arg5[%c9_69] : memref<12xf32, #tpu.memory_space<smem>>
    %261 = vector.broadcast %260 : f32 to vector<1x256xf32>
    %262 = arith.mulf %252, %261 : vector<1x256xf32>
    %c11 = arith.constant 11 : index
    %263 = memref.load %arg5[%c11] : memref<12xf32, #tpu.memory_space<smem>>
    %264 = vector.broadcast %263 : f32 to vector<1x256xf32>
    %265 = arith.addf %262, %264 : vector<1x256xf32>
    %266 = math.tanh %265 : vector<1x256xf32>
    %cst_70 = arith.constant 1.000000e+00 : f32
    %267 = vector.broadcast %cst_70 : f32 to vector<1x256xf32>
    %268 = arith.addf %259, %267 : vector<1x256xf32>
    %cst_71 = arith.constant 1.600000e+01 : f32
    %269 = vector.broadcast %cst_71 : f32 to vector<1x256xf32>
    %270 = arith.mulf %268, %269 : vector<1x256xf32>
    %cst_72 = arith.constant 1.000000e+00 : f32
    %271 = vector.broadcast %cst_72 : f32 to vector<1x256xf32>
    %272 = arith.subf %270, %271 : vector<1x256xf32>
    %cst_73 = arith.constant 5.000000e-01 : f32
    %273 = vector.broadcast %cst_73 : f32 to vector<1x256xf32>
    %274 = arith.mulf %272, %273 : vector<1x256xf32>
    %cst_74 = arith.constant 1.000000e+00 : f32
    %275 = vector.broadcast %cst_74 : f32 to vector<1x256xf32>
    %276 = arith.addf %266, %275 : vector<1x256xf32>
    %cst_75 = arith.constant 1.600000e+01 : f32
    %277 = vector.broadcast %cst_75 : f32 to vector<1x256xf32>
    %278 = arith.mulf %276, %277 : vector<1x256xf32>
    %cst_76 = arith.constant 1.000000e+00 : f32
    %279 = vector.broadcast %cst_76 : f32 to vector<1x256xf32>
    %280 = arith.subf %278, %279 : vector<1x256xf32>
    %cst_77 = arith.constant 5.000000e-01 : f32
    %281 = vector.broadcast %cst_77 : f32 to vector<1x256xf32>
    %282 = arith.mulf %280, %281 : vector<1x256xf32>
    %283 = vector.broadcast %274 : vector<1x256xf32> to vector<16x256xf32>
    %284 = arith.subf %283, %94 : vector<16x256xf32>
    %285 = math.absf %284 : vector<16x256xf32>
    %cst_78 = arith.constant 1.000000e+00 : f32
    %286 = vector.broadcast %cst_78 : f32 to vector<16x256xf32>
    %287 = arith.subf %286, %285 : vector<16x256xf32>
    %cst_79 = arith.constant 0.000000e+00 : f32
    %288 = vector.broadcast %cst_79 : f32 to vector<16x256xf32>
    %289 = arith.maximumf %288, %287 : vector<16x256xf32>
    %290 = vector.broadcast %282 : vector<1x256xf32> to vector<16x256xf32>
    %291 = arith.subf %290, %96 : vector<16x256xf32>
    %292 = math.absf %291 : vector<16x256xf32>
    %cst_80 = arith.constant 1.000000e+00 : f32
    %293 = vector.broadcast %cst_80 : f32 to vector<16x256xf32>
    %294 = arith.subf %293, %292 : vector<16x256xf32>
    %cst_81 = arith.constant 0.000000e+00 : f32
    %295 = vector.broadcast %cst_81 : f32 to vector<16x256xf32>
    %296 = arith.maximumf %295, %294 : vector<16x256xf32>
    %297 = tpu.concatenate %157, %223, %289 in 1 : vector<16x256xf32>, vector<16x256xf32>, vector<16x256xf32> -> vector<16x768xf32>
    %cst_82 = arith.constant dense<0.000000e+00> : vector<64x768xf32>
    %298 = tpu.matmul %98, %297, %cst_82 {dimension_numbers = #tpu.dot_dimension_numbers<[1], [0], [0], [1], [0, 0, 1, 1], [], []>} : vector<64x16xf32>, vector<16x768xf32>, vector<64x768xf32> -> vector<64x768xf32>
    %299 = vector.extract_strided_slice %298 {offsets = [0, 0], sizes = [64, 256], strides = [1, 1]} : vector<64x768xf32> to vector<64x256xf32>
    %300 = vector.shape_cast %299 : vector<64x256xf32> to vector<4x16x256xf32>
    %301 = vector.shape_cast %164 : vector<16x256xf32> to vector<1x16x256xf32>
    %302 = vector.broadcast %301 : vector<1x16x256xf32> to vector<4x16x256xf32>
    %303 = arith.mulf %300, %302 : vector<4x16x256xf32>
    %cst_83 = arith.constant dense<0.000000e+00> : vector<4x256xf32>
    %304 = vector.multi_reduction <add>, %303, %cst_83 [1] : vector<4x16x256xf32> to vector<4x256xf32>
    %305 = vector.extract_strided_slice %298 {offsets = [0, 256], sizes = [64, 256], strides = [1, 1]} : vector<64x768xf32> to vector<64x256xf32>
    %306 = vector.shape_cast %305 : vector<64x256xf32> to vector<4x16x256xf32>
    %307 = vector.shape_cast %230 : vector<16x256xf32> to vector<1x16x256xf32>
    %308 = vector.broadcast %307 : vector<1x16x256xf32> to vector<4x16x256xf32>
    %309 = arith.mulf %306, %308 : vector<4x16x256xf32>
    %cst_84 = arith.constant dense<0.000000e+00> : vector<4x256xf32>
    %310 = vector.multi_reduction <add>, %309, %cst_84 [1] : vector<4x16x256xf32> to vector<4x256xf32>
    %311 = vector.extract_strided_slice %298 {offsets = [0, 512], sizes = [64, 256], strides = [1, 1]} : vector<64x768xf32> to vector<64x256xf32>
    %312 = vector.shape_cast %311 : vector<64x256xf32> to vector<4x16x256xf32>
    %313 = vector.shape_cast %296 : vector<16x256xf32> to vector<1x16x256xf32>
    %314 = vector.broadcast %313 : vector<1x16x256xf32> to vector<4x16x256xf32>
    %315 = arith.mulf %312, %314 : vector<4x16x256xf32>
    %cst_85 = arith.constant dense<0.000000e+00> : vector<4x256xf32>
    %316 = vector.multi_reduction <add>, %315, %cst_85 [1] : vector<4x16x256xf32> to vector<4x256xf32>
    %317 = tpu.concatenate %304, %310, %316 in 0 : vector<4x256xf32>, vector<4x256xf32>, vector<4x256xf32> -> vector<12x256xf32>
    %c0_86 = arith.constant 0 : index
    %c0_87 = arith.constant 0 : index
    %c0_88 = arith.constant 0 : index
    %318 = vector.load %arg8[%c0_86, %c0_87, %c0_88] : memref<1x12x256xf32, #tpu.memory_space<vmem>>, vector<1x12x256xf32>
    %319 = vector.shape_cast %318 : vector<1x12x256xf32> to vector<12x256xf32>
    %320 = vector.shape_cast %317 : vector<12x256xf32> to vector<1x12x256xf32>
    tpu.vector_store %arg8[%c0_86, %c0_87, %c0_88], %320 {strides = array<i32>} : memref<1x12x256xf32, #tpu.memory_space<vmem>>, vector<1x12x256xf32>,
    return
  }
  func.func @transform_0(%arg0: i32, %arg1: i32) -> i32 {
    %c0_i32 = arith.constant 0 : i32
    %c0_i32_0 = arith.constant 0 : i32
    return %c0_i32 : i32
  }
  func.func @transform_1(%arg0: i32, %arg1: i32) -> i32 {
    %c0_i32 = arith.constant 0 : i32
    %c0_i32_0 = arith.constant 0 : i32
    return %c0_i32 : i32
  }
  func.func @transform_2(%arg0: i32, %arg1: i32) -> i32 {
    %c0_i32 = arith.constant 0 : i32
    %c0_i32_0 = arith.constant 0 : i32
    return %c0_i32 : i32
  }
  func.func @transform_3(%arg0: i32, %arg1: i32) -> i32 {
    %c0_i32 = arith.constant 0 : i32
    %c0_i32_0 = arith.constant 0 : i32
    return %c0_i32 : i32
  }
  func.func @transform_4(%arg0: i32, %arg1: i32) -> (i32, i32, i32) {
    %c0_i32 = arith.constant 0 : i32
    %c0_i32_0 = arith.constant 0 : i32
    return %arg0, %c0_i32, %arg1 : i32, i32, i32
  }
  func.func @transform_5(%arg0: i32, %arg1: i32) -> (i32, i32, i32) {
    %c0_i32 = arith.constant 0 : i32
    %c0_i32_0 = arith.constant 0 : i32
    %c0_i32_1 = arith.constant 0 : i32
    return %arg0, %c0_i32, %c0_i32_0 : i32, i32, i32
  }
  func.func @transform_6(%arg0: i32, %arg1: i32) -> (i32, i32, i32) {
    %c0_i32 = arith.constant 0 : i32
    %c0_i32_0 = arith.constant 0 : i32
    return %arg0, %c0_i32, %arg1 : i32, i32, i32
  }
}

</mosaic_0001>

<llo_original>
// kernel: tpu_custom_call.1
$region0: #{tpu_custom_call.1}
  #allocation0 [shape = 'u32[]', space=smem, size = 0x4, offset = 0x4, fixed_abs, tag = 'smem constant byte address 0x4 - core index']
  #allocation1 [shape = 'u32[144,128]{1,0:T(1,128)}', space=vmem, size = 0x12000, scoped, tag = 'internal scratch']
  %s0 = inlined_call_operand.vmem [shape: f32[18], index: 0, kind: input, shape index: {}]
  %s1 = inlined_call_operand.vmem [shape: f32[6], index: 1, kind: input, shape index: {}]
  %s2 = inlined_call_operand.vmem [shape: f32[27], index: 2, kind: input, shape index: {}]
  %s3 = inlined_call_operand.vmem [shape: f32[12], index: 3, kind: input, shape index: {}]
  %s4 = inlined_call_operand.vmem [shape: f32[2,3,256], index: 4, kind: input, shape index: {}]
  %s5 = inlined_call_operand.vmem [shape: f32[2,64,16], index: 5, kind: input, shape index: {}]
  %s6 = inlined_call_operand.vmem [shape: f32[2,12,256], index: 6, kind: output, shape index: {}]
  %s7 = sld [smem:[#allocation0]]
  $region73: #{tpu_custom_call.1} parent=0
    _
  %s9 = ssub.s32 1, %s7
  %s10 = scalar_select 0, %s9, %s7
  $region1: #{tpu_custom_call.1} parent=0
    #allocation2 [shape = 'u8[512]{0}', space=smem, size = 0x200, scoped, tag = 'input window, operand 0, single buffered']
    #allocation3 [shape = 's32[2]{0}', space=sflag, size = 0x8, scoped, tag = 'scoped memory for tpu_custom_call.1']
    #allocation4 [shape = 'u8[512]{0}', space=smem, size = 0x200, scoped, tag = 'input window, operand 1, single buffered']
    #allocation5 [shape = 's32[1]{0}', space=sflag, size = 0x4, scoped, tag = 'scoped memory for tpu_custom_call.1']
    #allocation6 [shape = 'u8[512]{0}', space=smem, size = 0x200, scoped, tag = 'input window, operand 2, single buffered']
    #allocation7 [shape = 'u8[512]{0}', space=smem, size = 0x200, scoped, tag = 'input window, operand 3, single buffered']
    #allocation8 [shape = 's32[1]{0}', space=sflag, size = 0x4, scoped, tag = 'scoped memory for tpu_custom_call.1']
    %11 = vsyncpa [#allocation3], 0
    %12 = vsyncpa [#allocation5], 0
    %13 = vsyncpa [#allocation8], 0
    loop: start=0, step=1, limit=4
    $region2: #{tpu_custom_call.1} parent=1 // loop_pre_header
      _
    $region3: #{tpu_custom_call.1} parent=1 // loop_header
      %s15 = sphi 0, %s19
      %p16 = scmp.ge.s32.totalorder %s15, 4
      %s22 = sphi 0, %s34
      %s23 = sphi 0, %s30
      %s24 = sphi 0, %s22
      %s25 = sphi 0, %s23
      %s26 = sphi 0, %s24
      %s27 = sphi 0, %s25
      %s35 = sphi 0, %s35
      %s37 = sphi 0, %s35
      %s38 = sphi 0, %s37
      %s52 = sphi 0, %s38
      %s56 = sphi 0, %s56
      %s58 = sphi 0, %s56
      %s59 = sphi 0, %s58
      %s73 = sphi 0, %s59
      %s77 = sphi 0, %s77
      %s79 = sphi 0, %s77
      %s80 = sphi 0, %s79
      %s94 = sphi 0, %s80
      %s98 = sphi 0, %s98
      %s100 = sphi 0, %s98
      %s101 = sphi 0, %s100
      %s115 = sphi 0, %s101
      %s123 = sphi 0, %s125
      %s126 = sphi 0, %s123
      %s127 = sphi 0, %s126
      %s143 = sphi 0, %s127
      %s149 = sphi 0, %s151
      %s152 = sphi 0, %s149
      %s153 = sphi 0, %s152
      %s169 = sphi 0, %s153
      %s177 = sphi 0, %s179
      %s180 = sphi 0, %s177
      %s181 = sphi 0, %s180
      %s197 = sphi 0, %s181
    $region4: #{tpu_custom_call.1} parent=1 // loop_header_branch
      %18 = sbr.rel (%p16) target = $region8
    $region5: #{tpu_custom_call.1} parent=1 // loop_body
      %s20 = ssub.s32 %s15, 1
      %s21 = ssub.s32 %s15, 2
      %s28 = sadd.s32 1, %s23
      %p29 = scmp.ge.s32.totalorder %s28, 1
      %s30 = scalar_select %p29, 0, %s28
      %s31 = sadd.s32 1, %s22
      %s32 = scalar_select %p29, %s31, %s22
      %p33 = scmp.ge.s32.totalorder %s32, 2
      %s34 = scalar_select %p33, 0, %s32
      %s36 = sadd.s32 %s35, 1
      %p39 = scmp.eq.s32.totalorder %s15, 1
      %p40 = scmp.ne.s32.totalorder %s35, %s37
      %p41 = scmp.eq.s32.totalorder %s15, 0
      %p42 = por %p40, %p41
      %p43 = scmp.ne.s32.totalorder %s35, %s37
      %p44 = scmp.eq.s32.totalorder %s20, 1
      %p45 = por %p43, %p44
      %p46 = scmp.ne.s32.totalorder %s37, %s38
      %p47 = scmp.eq.s32.totalorder %s20, 0
      %p48 = por %p46, %p47
      %p49 = scmp.ne.s32.totalorder %s37, %s38
      %p50 = scmp.eq.s32.totalorder %s21, 1
      %p51 = por %p49, %p50
      %p53 = scmp.ne.s32.totalorder %s38, %s52
      %p54 = scmp.eq.s32.totalorder %s21, 0
      %p55 = por %p53, %p54
      %s57 = sadd.s32 %s56, 1
      %p60 = scmp.eq.s32.totalorder %s15, 1
      %p61 = scmp.ne.s32.totalorder %s56, %s58
      %p62 = scmp.eq.s32.totalorder %s15, 0
      %p63 = por %p61, %p62
      %p64 = scmp.ne.s32.totalorder %s56, %s58
      %p65 = scmp.eq.s32.totalorder %s20, 1
      %p66 = por %p64, %p65
      %p67 = scmp.ne.s32.totalorder %s58, %s59
      %p68 = scmp.eq.s32.totalorder %s20, 0
      %p69 = por %p67, %p68
      %p70 = scmp.ne.s32.totalorder %s58, %s59
      %p71 = scmp.eq.s32.totalorder %s21, 1
      %p72 = por %p70, %p71
      %p74 = scmp.ne.s32.totalorder %s59, %s73
      %p75 = scmp.eq.s32.totalorder %s21, 0
      %p76 = por %p74, %p75
      %s78 = sadd.s32 %s77, 1
      %p81 = scmp.eq.s32.totalorder %s15, 1
      %p82 = scmp.ne.s32.totalorder %s77, %s79
      %p83 = scmp.eq.s32.totalorder %s15, 0
      %p84 = por %p82, %p83
      %p85 = scmp.ne.s32.totalorder %s77, %s79
      %p86 = scmp.eq.s32.totalorder %s20, 1
      %p87 = por %p85, %p86
      %p88 = scmp.ne.s32.totalorder %s79, %s80
      %p89 = scmp.eq.s32.totalorder %s20, 0
      %p90 = por %p88, %p89
      %p91 = scmp.ne.s32.totalorder %s79, %s80
      %p92 = scmp.eq.s32.totalorder %s21, 1
      %p93 = por %p91, %p92
      %p95 = scmp.ne.s32.totalorder %s80, %s94
      %p96 = scmp.eq.s32.totalorder %s21, 0
      %p97 = por %p95, %p96
      %s99 = sadd.s32 %s98, 1
      %p102 = scmp.eq.s32.totalorder %s15, 1
      %p103 = scmp.ne.s32.totalorder %s98, %s100
      %p104 = scmp.eq.s32.totalorder %s15, 0
      %p105 = por %p103, %p104
      %p106 = scmp.ne.s32.totalorder %s98, %s100
      %p107 = scmp.eq.s32.totalorder %s20, 1
      %p108 = por %p106, %p107
      %p109 = scmp.ne.s32.totalorder %s100, %s101
      %p110 = scmp.eq.s32.totalorder %s20, 0
      %p111 = por %p109, %p110
      %p112 = scmp.ne.s32.totalorder %s100, %s101
      %p113 = scmp.eq.s32.totalorder %s21, 1
      %p114 = por %p112, %p113
      %p116 = scmp.ne.s32.totalorder %s101, %s115
      %p117 = scmp.eq.s32.totalorder %s21, 0
      %p118 = por %p116, %p117
      %s119 = ssub.s32 %s22, %s34
      %s120 = ssub.s32 %s23, %s30
      %s121 = sor.u32 %s119, %s120
      %p122 = scmp.eq.s32.totalorder %s121, 0
      %s124 = sadd.s32 %s123, 1
      %s125 = scalar_select %p122, %s123, %s124
      %p128 = pneg %p122
      %p129 = scmp.eq.s32.totalorder %s15, 1
      %p130 = por %p128, %p129
      %p131 = scmp.ne.s32.totalorder %s123, %s126
      %p132 = scmp.eq.s32.totalorder %s15, 0
      %p133 = por %p131, %p132
      %p134 = scmp.ne.s32.totalorder %s123, %s126
      %p135 = scmp.eq.s32.totalorder %s20, 1
      %p136 = por %p134, %p135
      %p137 = scmp.ne.s32.totalorder %s126, %s127
      %p138 = scmp.eq.s32.totalorder %s20, 0
      %p139 = por %p137, %p138
      %p140 = scmp.ne.s32.totalorder %s126, %s127
      %p141 = scmp.eq.s32.totalorder %s21, 1
      %p142 = por %p140, %p141
      %p144 = scmp.ne.s32.totalorder %s127, %s143
      %p145 = scmp.eq.s32.totalorder %s21, 0
      %p146 = por %p144, %p145
      %s147 = ssub.s32 %s22, %s34
      %p148 = scmp.eq.s32.totalorder %s147, 0
      %s150 = sadd.s32 %s149, 1
      %s151 = scalar_select %p148, %s149, %s150
      %p154 = pneg %p148
      %p155 = scmp.eq.s32.totalorder %s15, 1
      %p156 = por %p154, %p155
      %p157 = scmp.ne.s32.totalorder %s149, %s152
      %p158 = scmp.eq.s32.totalorder %s15, 0
      %p159 = por %p157, %p158
      %p160 = scmp.ne.s32.totalorder %s149, %s152
      %p161 = scmp.eq.s32.totalorder %s20, 1
      %p162 = por %p160, %p161
      %p163 = scmp.ne.s32.totalorder %s152, %s153
      %p164 = scmp.eq.s32.totalorder %s20, 0
      %p165 = por %p163, %p164
      %p166 = scmp.ne.s32.totalorder %s152, %s153
      %p167 = scmp.eq.s32.totalorder %s21, 1
      %p168 = por %p166, %p167
      %p170 = scmp.ne.s32.totalorder %s153, %s169
      %p171 = scmp.eq.s32.totalorder %s21, 0
      %p172 = por %p170, %p171
      %s173 = ssub.s32 %s22, %s34
      %s174 = ssub.s32 %s23, %s30
      %s175 = sor.u32 %s173, %s174
      %p176 = scmp.eq.s32.totalorder %s175, 0
      %s178 = sadd.s32 %s177, 1
      %s179 = scalar_select %p176, %s177, %s178
      %p182 = pneg %p176
      %p183 = scmp.eq.s32.totalorder %s15, 1
      %p184 = por %p182, %p183
      %p185 = scmp.ne.s32.totalorder %s177, %s180
      %p186 = scmp.eq.s32.totalorder %s15, 0
      %p187 = por %p185, %p186
      %p188 = scmp.ne.s32.totalorder %s177, %s180
      %p189 = scmp.eq.s32.totalorder %s20, 1
      %p190 = por %p188, %p189
      %p191 = scmp.ne.s32.totalorder %s180, %s181
      %p192 = scmp.eq.s32.totalorder %s20, 0
      %p193 = por %p191, %p192
      %p194 = scmp.ne.s32.totalorder %s180, %s181
      %p195 = scmp.eq.s32.totalorder %s21, 1
      %p196 = por %p194, %p195
      %p198 = scmp.ne.s32.totalorder %s181, %s197
      %p199 = scmp.eq.s32.totalorder %s21, 0
      %p200 = por %p198, %p199
      %p201 = scmp.le.s32.totalorder 1, %s15
      %p202 = scmp.lt.s32.totalorder %s15, 3
      %p203 = pnand %p201, %p202
      %p204 = pneg %p203
      // Predicated region
      $region9: #{tpu_custom_call.1} parent=5 // pred_check
        _
      $region10: #{tpu_custom_call.1} parent=5 // pred_check_branch
        %206 = sbr.rel (%p203) target = $region12
      $region11: #{tpu_custom_call.1} parent=5 // pred_region
        %s207 = ssub.s32 %s15, 1
        // Predicated region
        $region13: #{tpu_custom_call.1} parent=11 // pred_check
          %p208 = pneg %p48
        $region14: #{tpu_custom_call.1} parent=11 // pred_check_branch
          %210 = sbr.rel (%p208) target = $region16
        $region15: #{tpu_custom_call.1} parent=11 // pred_region
          %s212 = ssub.s32 16, 16
          %213 = vsyncadd [#allocation3], %s212
          %s215 = sshll.u32 %s0, 4
          %s216 = int_to_ptr.vmem [resolvable:$true] %s215
          %218 = dma.vmem_to_smem %s216, 16, [#allocation2], [#allocation3]
        $region16: #{tpu_custom_call.1} parent=11 // pred_fallthru
          _
        // Predicated region
        $region17: #{tpu_custom_call.1} parent=11 // pred_check
          %p219 = pneg %p69
        $region18: #{tpu_custom_call.1} parent=11 // pred_check_branch
          %221 = sbr.rel (%p219) target = $region20
        $region19: #{tpu_custom_call.1} parent=11 // pred_region
          %s223 = ssub.s32 16, 16
          %224 = vsyncadd [#allocation5], %s223
          %s226 = sshll.u32 %s1, 4
          %s227 = int_to_ptr.vmem [resolvable:$true] %s226
          %229 = dma.vmem_to_smem %s227, 16, [#allocation4], [#allocation5]
        $region20: #{tpu_custom_call.1} parent=11 // pred_fallthru
          _
        // Predicated region
        $region21: #{tpu_custom_call.1} parent=11 // pred_check
          %p230 = pneg %p90
        $region22: #{tpu_custom_call.1} parent=11 // pred_check_branch
          %232 = sbr.rel (%p230) target = $region24
        $region23: #{tpu_custom_call.1} parent=11 // pred_region
          %s234 = ssub.s32 16, 16
          %235 = vsyncadd [#allocation5], %s234
          %s237 = sshll.u32 %s2, 4
          %s238 = int_to_ptr.vmem [resolvable:$true] %s237
          %240 = dma.vmem_to_smem %s238, 16, [#allocation6], [#allocation5]
        $region24: #{tpu_custom_call.1} parent=11 // pred_fallthru
          _
        // Predicated region
        $region25: #{tpu_custom_call.1} parent=11 // pred_check
          %p241 = pneg %p111
        $region26: #{tpu_custom_call.1} parent=11 // pred_check_branch
          %243 = sbr.rel (%p241) target = $region28
        $region27: #{tpu_custom_call.1} parent=11 // pred_region
          %s245 = ssub.s32 16, 16
          %246 = vsyncadd [#allocation8], %s245
          %s248 = sshll.u32 %s3, 4
          %s249 = int_to_ptr.vmem [resolvable:$true] %s248
          %251 = dma.vmem_to_smem %s249, 16, [#allocation7], [#allocation8]
        $region28: #{tpu_custom_call.1} parent=11 // pred_fallthru
          _
      $region12: #{tpu_custom_call.1} parent=5 // pred_fallthru
        _
      %p252 = scmp.lt.s32.totalorder %s15, 2
      // Predicated region
      $region29: #{tpu_custom_call.1} parent=5 // pred_check
        %p253 = pneg %p252
      $region30: #{tpu_custom_call.1} parent=5 // pred_check_branch
        %255 = sbr.rel (%p253) target = $region32
      $region31: #{tpu_custom_call.1} parent=5 // pred_region
        // Predicated region
        $region33: #{tpu_custom_call.1} parent=31 // pred_check
          %p256 = pneg %p133
        $region34: #{tpu_custom_call.1} parent=31 // pred_check_branch
          %258 = sbr.rel (%p256) target = $region36
        $region35: #{tpu_custom_call.1} parent=31 // pred_region
          %s259 = smul.u32 2, %s23
          %p260 = scmp.lt.s32.totalorder %s22, 1
          %s261 = scalar_select %p260, %s22, 1
          %p262 = scmp.lt.s32.totalorder %s259, 1
          %s263 = scalar_select %p262, %s259, 1
          %s264 = smul.addr %s261, 2
          %s265 = sadd.s32 %s263, %s264
          %s266 = smul.addr %s265, 4
          %s267 = scalar_lea.vmem %s4, %s266
          %s268 = smul.u32 2, %s23
        $region36: #{tpu_custom_call.1} parent=31 // pred_fallthru
          _
        // Predicated region
        $region37: #{tpu_custom_call.1} parent=31 // pred_check
          %p269 = pneg %p159
        $region38: #{tpu_custom_call.1} parent=31 // pred_check_branch
          %271 = sbr.rel (%p269) target = $region40
        $region39: #{tpu_custom_call.1} parent=31 // pred_region
          %p272 = scmp.lt.s32.totalorder %s22, 1
          %s273 = scalar_select %p272, %s22, 1
          %s274 = smul.addr %s273, 8
          %s275 = smul.addr %s274, 8
          %s276 = scalar_lea.vmem %s5, %s275
        $region40: #{tpu_custom_call.1} parent=31 // pred_fallthru
          _
      $region32: #{tpu_custom_call.1} parent=5 // pred_fallthru
        _
      %p277 = scmp.le.s32.totalorder 1, %s15
      %p278 = scmp.lt.s32.totalorder %s15, 3
      %p279 = pnand %p277, %p278
      %p280 = pneg %p279
      // Predicated region
      $region41: #{tpu_custom_call.1} parent=5 // pred_check
        _
      $region42: #{tpu_custom_call.1} parent=5 // pred_check_branch
        %282 = sbr.rel (%p279) target = $region44
      $region43: #{tpu_custom_call.1} parent=5 // pred_region
        %s283 = ssub.s32 %s15, 1
        // Predicated region
        $region45: #{tpu_custom_call.1} parent=43 // pred_check
          %p284 = pneg %p48
        $region46: #{tpu_custom_call.1} parent=43 // pred_check_branch
          %286 = sbr.rel (%p284) target = $region48
        $region47: #{tpu_custom_call.1} parent=43 // pred_region
          %287 = dma.done [#allocation3], 16
        $region48: #{tpu_custom_call.1} parent=43 // pred_fallthru
          _
        // Predicated region
        $region49: #{tpu_custom_call.1} parent=43 // pred_check
          %p288 = pneg %p69
        $region50: #{tpu_custom_call.1} parent=43 // pred_check_branch
          %290 = sbr.rel (%p288) target = $region52
        $region51: #{tpu_custom_call.1} parent=43 // pred_region
          %291 = dma.done [#allocation5], 16
        $region52: #{tpu_custom_call.1} parent=43 // pred_fallthru
          _
        // Predicated region
        $region53: #{tpu_custom_call.1} parent=43 // pred_check
          %p292 = pneg %p90
        $region54: #{tpu_custom_call.1} parent=43 // pred_check_branch
          %294 = sbr.rel (%p292) target = $region56
        $region55: #{tpu_custom_call.1} parent=43 // pred_region
          %295 = dma.done [#allocation5], 16
        $region56: #{tpu_custom_call.1} parent=43 // pred_fallthru
          _
        // Predicated region
        $region57: #{tpu_custom_call.1} parent=43 // pred_check
          %p296 = pneg %p111
        $region58: #{tpu_custom_call.1} parent=43 // pred_check_branch
          %298 = sbr.rel (%p296) target = $region60
        $region59: #{tpu_custom_call.1} parent=43 // pred_region
          %299 = dma.done [#allocation8], 16
        $region60: #{tpu_custom_call.1} parent=43 // pred_fallthru
          _
        %300 = sfence
        %p301 = pneg %p48
        %p302 = pneg %p45
        %p303 = pneg %p69
        %p304 = pneg %p66
        %p305 = pneg %p90
        %p306 = pneg %p87
        %p307 = pneg %p111
        %p308 = pneg %p108
        %s309 = smul.u32 2, %s25
        %p310 = scmp.lt.s32.totalorder %s24, 1
        %s311 = scalar_select %p310, %s24, 1
        %p312 = scmp.lt.s32.totalorder %s309, 1
        %s313 = scalar_select %p312, %s309, 1
        %s314 = smul.addr %s311, 2
        %s315 = sadd.s32 %s313, %s314
        %s316 = smul.addr %s315, 4
        %s317 = scalar_lea.vmem %s4, %s316
        %p318 = pneg %p139
        %p319 = pneg %p136
        %p320 = scmp.lt.s32.totalorder %s24, 1
        %s321 = scalar_select %p320, %s24, 1
        %s322 = smul.addr %s321, 8
        %s323 = smul.addr %s322, 8
        %s324 = scalar_lea.vmem %s5, %s323
        %p325 = pneg %p165
        %p326 = pneg %p162
        %p327 = pneg %p193
        %p328 = pneg %p190
        %s329 = smul.u32 2, %s25
        %p330 = scmp.lt.s32.totalorder %s24, 1
        %s331 = scalar_select %p330, %s24, 1
        %p332 = scmp.lt.s32.totalorder %s329, 1
        %s333 = scalar_select %p332, %s329, 1
        %s334 = smul.addr %s331, 4
        %s335 = sadd.s32 %s333, %s334
        %s336 = smul.addr %s335, 8
        %s337 = scalar_lea.vmem %s6, %s336
        %s338 = smul.u32 2, %s25
        %p339 = scmp.lt.s32.totalorder %s24, 1
        %s340 = scalar_select %p339, %s24, 1
        %p341 = scmp.lt.s32.totalorder %s338, 1
        %s342 = scalar_select %p341, %s338, 1
        %s343 = smul.addr %s340, 2
        %s344 = sadd.s32 %s342, %s343
        %s345 = smul.addr %s344, 4
        %s346 = scalar_lea.vmem %s4, %s345
        %s347 = smul.u32 2, %s25
        %p348 = scmp.lt.s32.totalorder %s24, 1
        %s349 = scalar_select %p348, %s24, 1
        %s350 = smul.addr %s349, 8
        %s351 = smul.addr %s350, 8
        %s352 = scalar_lea.vmem %s5, %s351
        %s353 = smul.u32 2, %s25
        %p354 = scmp.lt.s32.totalorder %s24, 1
        %s355 = scalar_select %p354, %s24, 1
        %p356 = scmp.lt.s32.totalorder %s353, 1
        %s357 = scalar_select %p356, %s353, 1
        %s358 = smul.addr %s355, 4
        %s359 = sadd.s32 %s357, %s358
        %s360 = smul.addr %s359, 8
        %s361 = scalar_lea.vmem %s6, %s360
        %s362 = smul.u32 2, %s25
        %v363 = vld [vmem:[%s346] ss:$4 sm:$0x3]
        %s364 = scalar_lea.vmem %s346, 1
        %v365 = vld [vmem:[%s364] ss:$4 sm:$0x3]
        %s366 = scalar_lea.vmem %s346, 2
        %v367 = vld [vmem:[%s366] ss:$4 sm:$0x3]
        %s368 = smul.u32 %s24, 9
        %s369 = sld [smem:[#allocation2 + %s368]]
        %v370 = vstv %s369
        %v371 = vmul.f32 %v363, %v370
        %s372 = sadd.s32 %s368, 3
        %s373 = sld [smem:[#allocation2 + %s372]]
        %v374 = vstv %s373
        %v375 = vmul.f32 %v365, %v374
        %v376 = vadd.f32 %v371, %v375
        %s377 = sadd.s32 %s368, 6
        %s378 = sld [smem:[#allocation2 + %s377]]
        %v379 = vstv %s378
        %v380 = vmul.f32 %v367, %v379
        %v381 = vadd.f32 %v376, %v380
        %s382 = smul.u32 %s24, 3
        %s383 = sld [smem:[#allocation4 + %s382]]
        %v384 = vstv %s383
        %v385 = vadd.f32 %v381, %v384
        %s386 = sadd.s32 %s368, 1
        %s387 = sld [smem:[#allocation2 + %s386]]
        %v388 = vstv %s387
        %v389 = vmul.f32 %v363, %v388
        %s390 = sadd.s32 %s368, 4
        %s391 = sld [smem:[#allocation2 + %s390]]
        %v392 = vstv %s391
        %v393 = vmul.f32 %v365, %v392
        %v394 = vadd.f32 %v389, %v393
        %s395 = sadd.s32 %s368, 7
        %s396 = sld [smem:[#allocation2 + %s395]]
        %v397 = vstv %s396
        %v398 = vmul.f32 %v367, %v397
        %v399 = vadd.f32 %v394, %v398
        %s400 = sadd.s32 %s382, 1
        %s401 = sld [smem:[#allocation4 + %s400]]
        %v402 = vstv %s401
        %v403 = vadd.f32 %v399, %v402
        %s404 = sadd.s32 %s368, 2
        %s405 = sld [smem:[#allocation2 + %s404]]
        %v406 = vstv %s405
        %v407 = vmul.f32 %v363, %v406
        %s408 = sadd.s32 %s368, 5
        %s409 = sld [smem:[#allocation2 + %s408]]
        %v410 = vstv %s409
        %v411 = vmul.f32 %v365, %v410
        %v412 = vadd.f32 %v407, %v411
        %s413 = sadd.s32 %s368, 8
        %s414 = sld [smem:[#allocation2 + %s413]]
        %v415 = vstv %s414
        %v416 = vmul.f32 %v367, %v415
        %v417 = vadd.f32 %v412, %v416
        %s418 = sadd.s32 %s382, 2
        %s419 = sld [smem:[#allocation4 + %s418]]
        %v420 = vstv %s419
        %v421 = vadd.f32 %v417, %v420
        %v422 = vlaneseq
        %v423 = vshrl.u32 %v422, 7
        %v424 = vadd.s32 %v423, 8
        %v425 = vcvt.s32.f32 %v423
        %v426 = vcvt.s32.f32 %v424
        %v427 = vld [vmem:[%s352] sm:$0xff]
        %v428 = vld [vmem:[%s352 + $0x8] sm:$0xff]
        %v429 = vld [vmem:[%s352 + $0x10] sm:$0xff]
        %v430 = vld [vmem:[%s352 + $0x18] sm:$0xff]
        %v431 = vld [vmem:[%s352 + $0x20] sm:$0xff]
        %v432 = vld [vmem:[%s352 + $0x28] sm:$0xff]
        %v433 = vld [vmem:[%s352 + $0x30] sm:$0xff]
        %v434 = vld [vmem:[%s352 + $0x38] sm:$0xff]
        %s435 = sld [smem:[#allocation6]]
        %v436 = vstv %s435
        %v437 = vmul.f32 %v385, %v436
        %s438 = sld [smem:[#allocation6 + $0x3]]
        %v439 = vstv %s438
        %v440 = vmul.f32 %v403, %v439
        %v441 = vadd.f32 %v437, %v440
        %s442 = sld [smem:[#allocation6 + $0x6]]
        %v443 = vstv %s442
        %v444 = vmul.f32 %v421, %v443
        %v445 = vadd.f32 %v441, %v444
        %s446 = sld [smem:[#allocation6 + $0x1]]
        %v447 = vstv %s446
        %v448 = vmul.f32 %v385, %v447
        %s449 = sld [smem:[#allocation6 + $0x4]]
        %v450 = vstv %s449
        %v451 = vmul.f32 %v403, %v450
        %v452 = vadd.f32 %v448, %v451
        %s453 = sld [smem:[#allocation6 + $0x7]]
        %v454 = vstv %s453
        %v455 = vmul.f32 %v421, %v454
        %v456 = vadd.f32 %v452, %v455
        %s457 = sld [smem:[#allocation7]]
        %v458 = vstv %s457
        %v459 = vmul.f32 %v445, %v458
        %s460 = sld [smem:[#allocation7 + $0x2]]
        %v461 = vstv %s460
        %v462 = vadd.f32 %v459, %v461
        %v463 = vtanh.pop %v462
        %s464 = sld [smem:[#allocation7 + $0x1]]
        %v465 = vstv %s464
        %v466 = vmul.f32 %v456, %v465
        %s467 = sld [smem:[#allocation7 + $0x3]]
        %v468 = vstv %s467
        %v469 = vadd.f32 %v466, %v468
        %v470 = vtanh.pop %v469
        %v471 = vadd.f32 %v463, 1.0
        %v472 = vmul.f32 %v471, 16.0
        %v473 = vsub.f32 %v472, 1.0
        %v474 = vmul.f32 %v473, 0.5
        %v475 = vadd.f32 %v470, 1.0
        %v476 = vmul.f32 %v475, 16.0
        %v477 = vsub.f32 %v476, 1.0
        %v478 = vmul.f32 %v477, 0.5
        %v480 = vlaneseq
        %v481 = vshrl.u32 %v480, 7
        %v482 = vsub.s32 0, %v481
        %v483 = vrot.slane %v474, %v482
        %v484 = vlaneseq
        %v485 = vshrl.u32 %v484, 7
        %v486 = vsub.s32 1, %v485
        %v487 = vrot.slane %v474, %v486
        %v490 = vsub.f32 %v483, %v425
        %v491 = vsub.f32 %v487, %v425
        %v492 = vsub.f32 %v483, %v426
        %v493 = vsub.f32 %v487, %v426
        %v494 = vand.u32 2147483647, %v490
        %v495 = vand.u32 2147483647, %v491
        %v496 = vand.u32 2147483647, %v492
        %v497 = vand.u32 2147483647, %v493
        %v498 = vsub.f32 1.0, %v494
        %v499 = vsub.f32 1.0, %v495
        %v500 = vsub.f32 1.0, %v496
        %v501 = vsub.f32 1.0, %v497
        %v502 = vmax.f32 %v498, 0.0
        %v503 = vmax.f32 %v499, 0.0
        %v504 = vmax.f32 %v500, 0.0
        %v505 = vmax.f32 %v501, 0.0
        %v507 = vlaneseq
        %v508 = vshrl.u32 %v507, 7
        %v509 = vsub.s32 0, %v508
        %v510 = vrot.slane %v478, %v509
        %v511 = vlaneseq
        %v512 = vshrl.u32 %v511, 7
        %v513 = vsub.s32 1, %v512
        %v514 = vrot.slane %v478, %v513
        %v517 = vsub.f32 %v510, %v425
        %v518 = vsub.f32 %v514, %v425
        %v519 = vsub.f32 %v510, %v426
        %v520 = vsub.f32 %v514, %v426
        %v521 = vand.u32 2147483647, %v517
        %v522 = vand.u32 2147483647, %v518
        %v523 = vand.u32 2147483647, %v519
        %v524 = vand.u32 2147483647, %v520
        %v525 = vsub.f32 1.0, %v521
        %v526 = vsub.f32 1.0, %v522
        %v527 = vsub.f32 1.0, %v523
        %v528 = vsub.f32 1.0, %v524
        %v529 = vmax.f32 %v525, 0.0
        %v530 = vmax.f32 %v526, 0.0
        %v531 = vmax.f32 %v527, 0.0
        %v532 = vmax.f32 %v528, 0.0
        %s533 = sld [smem:[#allocation6 + $0x9]]
        %v534 = vstv %s533
        %v535 = vmul.f32 %v385, %v534
        %s536 = sld [smem:[#allocation6 + $0xc]]
        %v537 = vstv %s536
        %v538 = vmul.f32 %v403, %v537
        %v539 = vadd.f32 %v535, %v538
        %s540 = sld [smem:[#allocation6 + $0xf]]
        %v541 = vstv %s540
        %v542 = vmul.f32 %v421, %v541
        %v543 = vadd.f32 %v539, %v542
        %s544 = sld [smem:[#allocation6 + $0xa]]
        %v545 = vstv %s544
        %v546 = vmul.f32 %v385, %v545
        %s547 = sld [smem:[#allocation6 + $0xd]]
        %v548 = vstv %s547
        %v549 = vmul.f32 %v403, %v548
        %v550 = vadd.f32 %v546, %v549
        %s551 = sld [smem:[#allocation6 + $0x10]]
        %v552 = vstv %s551
        %v553 = vmul.f32 %v421, %v552
        %v554 = vadd.f32 %v550, %v553
        %s555 = sld [smem:[#allocation7 + $0x4]]
        %v556 = vstv %s555
        %v557 = vmul.f32 %v543, %v556
        %s558 = sld [smem:[#allocation7 + $0x6]]
        %v559 = vstv %s558
        %v560 = vadd.f32 %v557, %v559
        %v561 = vtanh.pop %v560
        %s562 = sld [smem:[#allocation7 + $0x5]]
        %v563 = vstv %s562
        %v564 = vmul.f32 %v554, %v563
        %s565 = sld [smem:[#allocation7 + $0x7]]
        %v566 = vstv %s565
        %v567 = vadd.f32 %v564, %v566
        %v568 = vtanh.pop %v567
        %v569 = vadd.f32 %v561, 1.0
        %v570 = vmul.f32 %v569, 16.0
        %v571 = vsub.f32 %v570, 1.0
        %v572 = vmul.f32 %v571, 0.5
        %v573 = vadd.f32 %v568, 1.0
        %v574 = vmul.f32 %v573, 16.0
        %v575 = vsub.f32 %v574, 1.0
        %v576 = vmul.f32 %v575, 0.5
        %v578 = vlaneseq
        %v579 = vshrl.u32 %v578, 7
        %v580 = vsub.s32 0, %v579
        %v581 = vrot.slane %v572, %v580
        %v582 = vlaneseq
        %v583 = vshrl.u32 %v582, 7
        %v584 = vsub.s32 1, %v583
        %v585 = vrot.slane %v572, %v584
        %v588 = vsub.f32 %v581, %v425
        %v589 = vsub.f32 %v585, %v425
        %v590 = vsub.f32 %v581, %v426
        %v591 = vsub.f32 %v585, %v426
        %v592 = vand.u32 2147483647, %v588
        %v593 = vand.u32 2147483647, %v589
        %v594 = vand.u32 2147483647, %v590
        %v595 = vand.u32 2147483647, %v591
        %v596 = vsub.f32 1.0, %v592
        %v597 = vsub.f32 1.0, %v593
        %v598 = vsub.f32 1.0, %v594
        %v599 = vsub.f32 1.0, %v595
        %v600 = vmax.f32 %v596, 0.0
        %v601 = vmax.f32 %v597, 0.0
        %v602 = vmax.f32 %v598, 0.0
        %v603 = vmax.f32 %v599, 0.0
        %v605 = vlaneseq
        %v606 = vshrl.u32 %v605, 7
        %v607 = vsub.s32 0, %v606
        %v608 = vrot.slane %v576, %v607
        %v609 = vlaneseq
        %v610 = vshrl.u32 %v609, 7
        %v611 = vsub.s32 1, %v610
        %v612 = vrot.slane %v576, %v611
        %v615 = vsub.f32 %v608, %v425
        %v616 = vsub.f32 %v612, %v425
        %v617 = vsub.f32 %v608, %v426
        %v618 = vsub.f32 %v612, %v426
        %v619 = vand.u32 2147483647, %v615
        %v620 = vand.u32 2147483647, %v616
        %v621 = vand.u32 2147483647, %v617
        %v622 = vand.u32 2147483647, %v618
        %v623 = vsub.f32 1.0, %v619
        %v624 = vsub.f32 1.0, %v620
        %v625 = vsub.f32 1.0, %v621
        %v626 = vsub.f32 1.0, %v622
        %v627 = vmax.f32 %v623, 0.0
        %v628 = vmax.f32 %v624, 0.0
        %v629 = vmax.f32 %v625, 0.0
        %v630 = vmax.f32 %v626, 0.0
        %s631 = sld [smem:[#allocation6 + $0x12]]
        %v632 = vstv %s631
        %v633 = vmul.f32 %v385, %v632
        %s634 = sld [smem:[#allocation6 + $0x15]]
        %v635 = vstv %s634
        %v636 = vmul.f32 %v403, %v635
        %v637 = vadd.f32 %v633, %v636
        %s638 = sld [smem:[#allocation6 + $0x18]]
        %v639 = vstv %s638
        %v640 = vmul.f32 %v421, %v639
        %v641 = vadd.f32 %v637, %v640
        %s642 = sld [smem:[#allocation6 + $0x13]]
        %v643 = vstv %s642
        %v644 = vmul.f32 %v385, %v643
        %s645 = sld [smem:[#allocation6 + $0x16]]
        %v646 = vstv %s645
        %v647 = vmul.f32 %v403, %v646
        %v648 = vadd.f32 %v644, %v647
        %s649 = sld [smem:[#allocation6 + $0x19]]
        %v650 = vstv %s649
        %v651 = vmul.f32 %v421, %v650
        %v652 = vadd.f32 %v648, %v651
        %s653 = sld [smem:[#allocation7 + $0x8]]
        %v654 = vstv %s653
        %v655 = vmul.f32 %v641, %v654
        %s656 = sld [smem:[#allocation7 + $0xa]]
        %v657 = vstv %s656
        %v658 = vadd.f32 %v655, %v657
        %v659 = vtanh.pop %v658
        %s660 = sld [smem:[#allocation7 + $0x9]]
        %v661 = vstv %s660
        %v662 = vmul.f32 %v652, %v661
        %s663 = sld [smem:[#allocation7 + $0xb]]
        %v664 = vstv %s663
        %v665 = vadd.f32 %v662, %v664
        %v666 = vtanh.pop %v665
        %v667 = vadd.f32 %v659, 1.0
        %v668 = vmul.f32 %v667, 16.0
        %v669 = vsub.f32 %v668, 1.0
        %v670 = vmul.f32 %v669, 0.5
        %v671 = vadd.f32 %v666, 1.0
        %v672 = vmul.f32 %v671, 16.0
        %v673 = vsub.f32 %v672, 1.0
        %v674 = vmul.f32 %v673, 0.5
        %v676 = vlaneseq
        %v677 = vshrl.u32 %v676, 7
        %v678 = vsub.s32 0, %v677
        %v679 = vrot.slane %v670, %v678
        %v680 = vlaneseq
        %v681 = vshrl.u32 %v680, 7
        %v682 = vsub.s32 1, %v681
        %v683 = vrot.slane %v670, %v682
        %v686 = vsub.f32 %v679, %v425
        %v687 = vsub.f32 %v683, %v425
        %v688 = vsub.f32 %v679, %v426
        %v689 = vsub.f32 %v683, %v426
        %v690 = vand.u32 2147483647, %v686
        %v691 = vand.u32 2147483647, %v687
        %v692 = vand.u32 2147483647, %v688
        %v693 = vand.u32 2147483647, %v689
        %v694 = vsub.f32 1.0, %v690
        %v695 = vsub.f32 1.0, %v691
        %v696 = vsub.f32 1.0, %v692
        %v697 = vsub.f32 1.0, %v693
        %v698 = vmax.f32 %v694, 0.0
        %v699 = vmax.f32 %v695, 0.0
        %v700 = vmax.f32 %v696, 0.0
        %v701 = vmax.f32 %v697, 0.0
        %v703 = vlaneseq
        %v704 = vshrl.u32 %v703, 7
        %v705 = vsub.s32 0, %v704
        %v706 = vrot.slane %v674, %v705
        %v707 = vlaneseq
        %v708 = vshrl.u32 %v707, 7
        %v709 = vsub.s32 1, %v708
        %v710 = vrot.slane %v674, %v709
        %v713 = vsub.f32 %v706, %v425
        %v714 = vsub.f32 %v710, %v425
        %v715 = vsub.f32 %v706, %v426
        %v716 = vsub.f32 %v710, %v426
        %v717 = vand.u32 2147483647, %v713
        %v718 = vand.u32 2147483647, %v714
        %v719 = vand.u32 2147483647, %v715
        %v720 = vand.u32 2147483647, %v716
        %v721 = vsub.f32 1.0, %v717
        %v722 = vsub.f32 1.0, %v718
        %v723 = vsub.f32 1.0, %v719
        %v724 = vsub.f32 1.0, %v720
        %v725 = vmax.f32 %v721, 0.0
        %v726 = vmax.f32 %v722, 0.0
        %v727 = vmax.f32 %v723, 0.0
        %v728 = vmax.f32 %v724, 0.0
        %vm729 = vcmask 130048
        %v731 = vsel %vm729, %v427, 0
        %v734 = vsel %vm729, %v428, 0
        %v737 = vsel %vm729, %v429, 0
        %v740 = vsel %vm729, %v430, 0
        %v743 = vsel %vm729, %v431, 0
        %v746 = vsel %vm729, %v432, 0
        %v749 = vsel %vm729, %v433, 0
        %v752 = vsel %vm729, %v434, 0
        %754 = vmatprep.subr.mxu0 %v503
        %755 = vmatpush1.msra.mxu0 %v502
        %756 = vmatprep.subr.mxu0 %v505
        %757 = vmatpush1.msra.mxu0 %v504
        %758 = vmatprep.subr.mxu0 0.0
        %759 = vmatpush1.msra.mxu0 0.0
        %760 = vmatprep.subr.mxu0 0.0
        %761 = vmatpush1.msra.mxu0 0.0
        %762 = vmatprep.subr.mxu0 0.0
        %763 = vmatpush1.msra.mxu0 0.0
        %764 = vmatprep.subr.mxu0 0.0
        %765 = vmatpush1.msra.mxu0 0.0
        %766 = vmatprep.subr.mxu0 0.0
        %767 = vmatpush1.msra.mxu0 0.0
        %768 = vmatprep.subr.mxu0 0.0
        %769 = vmatpush1.msra.mxu0 0.0
        %770 = vmatprep.subr.mxu0 0.0
        %771 = vmatpush1.msra.mxu0 0.0
        %772 = vmatprep.subr.mxu0 0.0
        %773 = vmatpush1.msra.mxu0 0.0
        %774 = vmatprep.subr.mxu0 0.0
        %775 = vmatpush1.msra.mxu0 0.0
        %776 = vmatprep.subr.mxu0 0.0
        %777 = vmatpush1.msra.mxu0 0.0
        %778 = vmatprep.subr.mxu0 0.0
        %779 = vmatpush1.msra.mxu0 0.0
        %780 = vmatprep.subr.mxu0 0.0
        %781 = vmatpush1.msra.mxu0 0.0
        %782 = vmatprep.subr.mxu0 0.0
        %783 = vmatpush1.msra.mxu0 0.0
        %784 = vmatprep.subr.mxu0 0.0
        %785 = vmatpush1.msra.mxu0 0.0
        %786 = vmatprep.subr.mxu0 0.0
        %787 = vmatpush1.msra.mxu0 0.0
        %788 = vmatprep.subr.mxu0 0.0
        %789 = vmatpush1.msra.mxu0 0.0
        %790 = vmatprep.subr.mxu0 0.0
        %791 = vmatpush1.msra.mxu0 0.0
        %792 = vmatprep.subr.mxu0 0.0
        %793 = vmatpush1.msra.mxu0 0.0
        %794 = vmatprep.subr.mxu0 0.0
        %795 = vmatpush1.msra.mxu0 0.0
        %796 = vmatprep.subr.mxu0 0.0
        %797 = vmatpush1.msra.mxu0 0.0
        %798 = vmatprep.subr.mxu0 0.0
        %799 = vmatpush1.msra.mxu0 0.0
        %800 = vmatprep.subr.mxu0 0.0
        %801 = vmatpush1.msra.mxu0 0.0
        %802 = vmatprep.subr.mxu0 0.0
        %803 = vmatpush1.msra.mxu0 0.0
        %804 = vmatprep.subr.mxu0 0.0
        %805 = vmatpush1.msra.mxu0 0.0
        %806 = vmatprep.subr.mxu0 0.0
        %807 = vmatpush1.msra.mxu0 0.0
        %808 = vmatprep.subr.mxu0 0.0
        %809 = vmatpush1.msra.mxu0 0.0
        %810 = vmatprep.subr.mxu0 0.0
        %811 = vmatpush1.msra.mxu0 0.0
        %812 = vmatprep.subr.mxu0 0.0
        %813 = vmatpush1.msra.mxu0 0.0
        %814 = vmatprep.subr.mxu0 0.0
        %815 = vmatpush1.msra.mxu0 0.0
        %816 = vmatprep.subr.mxu0 0.0
        %817 = vmatpush1.msra.mxu0 0.0
        %818 = vmatprep.mubr.f32.mxu0 0.0
        %819 = vmatmul.mubr.f32.gmra.mrb[0].mxu0 %v731
        %v820 = vpop.f32.mrb[0].mxu0
        %v821 = vadd.f32 0.0, %v820
        %v822 = vpop.f32.mrb[0].mxu0
        %v823 = vadd.f32 0.0, %v822
        %824 = vmatprep.mubr.f32.mxu0 0.0
        %825 = vmatmul.mubr.f32.gmra.mrb[0].mxu0 %v734
        %v826 = vpop.f32.mrb[0].mxu0
        %v827 = vadd.f32 0.0, %v826
        %v828 = vpop.f32.mrb[0].mxu0
        %v829 = vadd.f32 0.0, %v828
        %830 = vmatprep.mubr.f32.mxu0 0.0
        %831 = vmatmul.mubr.f32.gmra.mrb[0].mxu0 %v737
        %v832 = vpop.f32.mrb[0].mxu0
        %v833 = vadd.f32 0.0, %v832
        %v834 = vpop.f32.mrb[0].mxu0
        %v835 = vadd.f32 0.0, %v834
        %836 = vmatprep.mubr.f32.mxu0 0.0
        %837 = vmatmul.mubr.f32.gmra.mrb[0].mxu0 %v740
        %v838 = vpop.f32.mrb[0].mxu0
        %v839 = vadd.f32 0.0, %v838
        %v840 = vpop.f32.mrb[0].mxu0
        %v841 = vadd.f32 0.0, %v840
        %842 = vmatprep.mubr.f32.mxu0 0.0
        %843 = vmatmul.mubr.f32.gmra.mrb[0].mxu0 %v743
        %v844 = vpop.f32.mrb[0].mxu0
        %v845 = vadd.f32 0.0, %v844
        %v846 = vpop.f32.mrb[0].mxu0
        %v847 = vadd.f32 0.0, %v846
        %848 = vmatprep.mubr.f32.mxu0 0.0
        %849 = vmatmul.mubr.f32.gmra.mrb[0].mxu0 %v746
        %v850 = vpop.f32.mrb[0].mxu0
        %v851 = vadd.f32 0.0, %v850
        %v852 = vpop.f32.mrb[0].mxu0
        %v853 = vadd.f32 0.0, %v852
        %854 = vmatprep.mubr.f32.mxu0 0.0
        %855 = vmatmul.mubr.f32.gmra.mrb[0].mxu0 %v749
        %v856 = vpop.f32.mrb[0].mxu0
        %v857 = vadd.f32 0.0, %v856
        %v858 = vpop.f32.mrb[0].mxu0
        %v859 = vadd.f32 0.0, %v858
        %860 = vmatprep.mubr.f32.mxu0 0.0
        %861 = vmatmul.mubr.f32.gmra.mrb[0].mxu0 %v752
        %v862 = vpop.f32.mrb[0].mxu0
        %v863 = vadd.f32 0.0, %v862
        %v864 = vpop.f32.mrb[0].mxu0
        %v865 = vadd.f32 0.0, %v864
        %866 = vdwg.mxu0
        %867 = vmatprep.subr.mxu0 %v601
        %868 = vmatpush1.msra.mxu0 %v600
        %869 = vmatprep.subr.mxu0 %v603
        %870 = vmatpush1.msra.mxu0 %v602
        %871 = vmatprep.subr.mxu0 0.0
        %872 = vmatpush1.msra.mxu0 0.0
        %873 = vmatprep.subr.mxu0 0.0
        %874 = vmatpush1.msra.mxu0 0.0
        %875 = vmatprep.subr.mxu0 0.0
        %876 = vmatpush1.msra.mxu0 0.0
        %877 = vmatprep.subr.mxu0 0.0
        %878 = vmatpush1.msra.mxu0 0.0
        %879 = vmatprep.subr.mxu0 0.0
        %880 = vmatpush1.msra.mxu0 0.0
        %881 = vmatprep.subr.mxu0 0.0
        %882 = vmatpush1.msra.mxu0 0.0
        %883 = vmatprep.subr.mxu0 0.0
        %884 = vmatpush1.msra.mxu0 0.0
        %885 = vmatprep.subr.mxu0 0.0
        %886 = vmatpush1.msra.mxu0 0.0
        %887 = vmatprep.subr.mxu0 0.0
        %888 = vmatpush1.msra.mxu0 0.0
        %889 = vmatprep.subr.mxu0 0.0
        %890 = vmatpush1.msra.mxu0 0.0
        %891 = vmatprep.subr.mxu0 0.0
        %892 = vmatpush1.msra.mxu0 0.0
        %893 = vmatprep.subr.mxu0 0.0
        %894 = vmatpush1.msra.mxu0 0.0
        %895 = vmatprep.subr.mxu0 0.0
        %896 = vmatpush1.msra.mxu0 0.0
        %897 = vmatprep.subr.mxu0 0.0
        %898 = vmatpush1.msra.mxu0 0.0
        %899 = vmatprep.subr.mxu0 0.0
        %900 = vmatpush1.msra.mxu0 0.0
        %901 = vmatprep.subr.mxu0 0.0
        %902 = vmatpush1.msra.mxu0 0.0
        %903 = vmatprep.subr.mxu0 0.0
        %904 = vmatpush1.msra.mxu0 0.0
        %905 = vmatprep.subr.mxu0 0.0
        %906 = vmatpush1.msra.mxu0 0.0
        %907 = vmatprep.subr.mxu0 0.0
        %908 = vmatpush1.msra.mxu0 0.0
        %909 = vmatprep.subr.mxu0 0.0
        %910 = vmatpush1.msra.mxu0 0.0
        %911 = vmatprep.subr.mxu0 0.0
        %912 = vmatpush1.msra.mxu0 0.0
        %913 = vmatprep.subr.mxu0 0.0
        %914 = vmatpush1.msra.mxu0 0.0
        %915 = vmatprep.subr.mxu0 0.0
        %916 = vmatpush1.msra.mxu0 0.0
        %917 = vmatprep.subr.mxu0 0.0
        %918 = vmatpush1.msra.mxu0 0.0
        %919 = vmatprep.subr.mxu0 0.0
        %920 = vmatpush1.msra.mxu0 0.0
        %921 = vmatprep.subr.mxu0 0.0
        %922 = vmatpush1.msra.mxu0 0.0
        %923 = vmatprep.subr.mxu0 0.0
        %924 = vmatpush1.msra.mxu0 0.0
        %925 = vmatprep.subr.mxu0 0.0
        %926 = vmatpush1.msra.mxu0 0.0
        %927 = vmatprep.subr.mxu0 0.0
        %928 = vmatpush1.msra.mxu0 0.0
        %929 = vmatprep.subr.mxu0 0.0
        %930 = vmatpush1.msra.mxu0 0.0
        %931 = vmatprep.mubr.f32.mxu0 0.0
        %932 = vmatmul.mubr.f32.gmra.mrb[0].mxu0 %v731
        %v933 = vpop.f32.mrb[0].mxu0
        %v934 = vadd.f32 0.0, %v933
        %v935 = vpop.f32.mrb[0].mxu0
        %v936 = vadd.f32 0.0, %v935
        %937 = vmatprep.mubr.f32.mxu0 0.0
        %938 = vmatmul.mubr.f32.gmra.mrb[0].mxu0 %v734
        %v939 = vpop.f32.mrb[0].mxu0
        %v940 = vadd.f32 0.0, %v939
        %v941 = vpop.f32.mrb[0].mxu0
        %v942 = vadd.f32 0.0, %v941
        %943 = vmatprep.mubr.f32.mxu0 0.0
        %944 = vmatmul.mubr.f32.gmra.mrb[0].mxu0 %v737
        %v945 = vpop.f32.mrb[0].mxu0
        %v946 = vadd.f32 0.0, %v945
        %v947 = vpop.f32.mrb[0].mxu0
        %v948 = vadd.f32 0.0, %v947
        %949 = vmatprep.mubr.f32.mxu0 0.0
        %950 = vmatmul.mubr.f32.gmra.mrb[0].mxu0 %v740
        %v951 = vpop.f32.mrb[0].mxu0
        %v952 = vadd.f32 0.0, %v951
        %v953 = vpop.f32.mrb[0].mxu0
        %v954 = vadd.f32 0.0, %v953
        %955 = vmatprep.mubr.f32.mxu0 0.0
        %956 = vmatmul.mubr.f32.gmra.mrb[0].mxu0 %v743
        %v957 = vpop.f32.mrb[0].mxu0
        %v958 = vadd.f32 0.0, %v957
        %v959 = vpop.f32.mrb[0].mxu0
        %v960 = vadd.f32 0.0, %v959
        %961 = vmatprep.mubr.f32.mxu0 0.0
        %962 = vmatmul.mubr.f32.gmra.mrb[0].mxu0 %v746
        %v963 = vpop.f32.mrb[0].mxu0
        %v964 = vadd.f32 0.0, %v963
        %v965 = vpop.f32.mrb[0].mxu0
        %v966 = vadd.f32 0.0, %v965
        %967 = vmatprep.mubr.f32.mxu0 0.0
        %968 = vmatmul.mubr.f32.gmra.mrb[0].mxu0 %v749
        %v969 = vpop.f32.mrb[0].mxu0
        %v970 = vadd.f32 0.0, %v969
        %v971 = vpop.f32.mrb[0].mxu0
        %v972 = vadd.f32 0.0, %v971
        %973 = vmatprep.mubr.f32.mxu0 0.0
        %974 = vmatmul.mubr.f32.gmra.mrb[0].mxu0 %v752
        %v975 = vpop.f32.mrb[0].mxu0
        %v976 = vadd.f32 0.0, %v975
        %v977 = vpop.f32.mrb[0].mxu0
        %v978 = vadd.f32 0.0, %v977
        %979 = vdwg.mxu0
        %980 = vmatprep.subr.mxu0 %v699
        %981 = vmatpush1.msra.mxu0 %v698
        %982 = vmatprep.subr.mxu0 %v701
        %983 = vmatpush1.msra.mxu0 %v700
        %984 = vmatprep.subr.mxu0 0.0
        %985 = vmatpush1.msra.mxu0 0.0
        %986 = vmatprep.subr.mxu0 0.0
        %987 = vmatpush1.msra.mxu0 0.0
        %988 = vmatprep.subr.mxu0 0.0
        %989 = vmatpush1.msra.mxu0 0.0
        %990 = vmatprep.subr.mxu0 0.0
        %991 = vmatpush1.msra.mxu0 0.0
        %992 = vmatprep.subr.mxu0 0.0
        %993 = vmatpush1.msra.mxu0 0.0
        %994 = vmatprep.subr.mxu0 0.0
        %995 = vmatpush1.msra.mxu0 0.0
        %996 = vmatprep.subr.mxu0 0.0
        %997 = vmatpush1.msra.mxu0 0.0
        %998 = vmatprep.subr.mxu0 0.0
        %999 = vmatpush1.msra.mxu0 0.0
        %1000 = vmatprep.subr.mxu0 0.0
        %1001 = vmatpush1.msra.mxu0 0.0
        %1002 = vmatprep.subr.mxu0 0.0
        %1003 = vmatpush1.msra.mxu0 0.0
        %1004 = vmatprep.subr.mxu0 0.0
        %1005 = vmatpush1.msra.mxu0 0.0
        %1006 = vmatprep.subr.mxu0 0.0
        %1007 = vmatpush1.msra.mxu0 0.0
        %1008 = vmatprep.subr.mxu0 0.0
        %1009 = vmatpush1.msra.mxu0 0.0
        %1010 = vmatprep.subr.mxu0 0.0
        %1011 = vmatpush1.msra.mxu0 0.0
        %1012 = vmatprep.subr.mxu0 0.0
        %1013 = vmatpush1.msra.mxu0 0.0
        %1014 = vmatprep.subr.mxu0 0.0
        %1015 = vmatpush1.msra.mxu0 0.0
        %1016 = vmatprep.subr.mxu0 0.0
        %1017 = vmatpush1.msra.mxu0 0.0
        %1018 = vmatprep.subr.mxu0 0.0
        %1019 = vmatpush1.msra.mxu0 0.0
        %1020 = vmatprep.subr.mxu0 0.0
        %1021 = vmatpush1.msra.mxu0 0.0
        %1022 = vmatprep.subr.mxu0 0.0
        %1023 = vmatpush1.msra.mxu0 0.0
        %1024 = vmatprep.subr.mxu0 0.0
        %1025 = vmatpush1.msra.mxu0 0.0
        %1026 = vmatprep.subr.mxu0 0.0
        %1027 = vmatpush1.msra.mxu0 0.0
        %1028 = vmatprep.subr.mxu0 0.0
        %1029 = vmatpush1.msra.mxu0 0.0
        %1030 = vmatprep.subr.mxu0 0.0
        %1031 = vmatpush1.msra.mxu0 0.0
        %1032 = vmatprep.subr.mxu0 0.0
        %1033 = vmatpush1.msra.mxu0 0.0
        %1034 = vmatprep.subr.mxu0 0.0
        %1035 = vmatpush1.msra.mxu0 0.0
        %1036 = vmatprep.subr.mxu0 0.0
        %1037 = vmatpush1.msra.mxu0 0.0
        %1038 = vmatprep.subr.mxu0 0.0
        %1039 = vmatpush1.msra.mxu0 0.0
        %1040 = vmatprep.subr.mxu0 0.0
        %1041 = vmatpush1.msra.mxu0 0.0
        %1042 = vmatprep.subr.mxu0 0.0
        %1043 = vmatpush1.msra.mxu0 0.0
        %1044 = vmatprep.mubr.f32.mxu0 0.0
        %1045 = vmatmul.mubr.f32.gmra.mrb[0].mxu0 %v731
        %v1046 = vpop.f32.mrb[0].mxu0
        %v1047 = vadd.f32 0.0, %v1046
        %v1048 = vpop.f32.mrb[0].mxu0
        %v1049 = vadd.f32 0.0, %v1048
        %1050 = vmatprep.mubr.f32.mxu0 0.0
        %1051 = vmatmul.mubr.f32.gmra.mrb[0].mxu0 %v734
        %v1052 = vpop.f32.mrb[0].mxu0
        %v1053 = vadd.f32 0.0, %v1052
        %v1054 = vpop.f32.mrb[0].mxu0
        %v1055 = vadd.f32 0.0, %v1054
        %1056 = vmatprep.mubr.f32.mxu0 0.0
        %1057 = vmatmul.mubr.f32.gmra.mrb[0].mxu0 %v737
        %v1058 = vpop.f32.mrb[0].mxu0
        %v1059 = vadd.f32 0.0, %v1058
        %v1060 = vpop.f32.mrb[0].mxu0
        %v1061 = vadd.f32 0.0, %v1060
        %1062 = vmatprep.mubr.f32.mxu0 0.0
        %1063 = vmatmul.mubr.f32.gmra.mrb[0].mxu0 %v740
        %v1064 = vpop.f32.mrb[0].mxu0
        %v1065 = vadd.f32 0.0, %v1064
        %v1066 = vpop.f32.mrb[0].mxu0
        %v1067 = vadd.f32 0.0, %v1066
        %1068 = vmatprep.mubr.f32.mxu0 0.0
        %1069 = vmatmul.mubr.f32.gmra.mrb[0].mxu0 %v743
        %v1070 = vpop.f32.mrb[0].mxu0
        %v1071 = vadd.f32 0.0, %v1070
        %v1072 = vpop.f32.mrb[0].mxu0
        %v1073 = vadd.f32 0.0, %v1072
        %1074 = vmatprep.mubr.f32.mxu0 0.0
        %1075 = vmatmul.mubr.f32.gmra.mrb[0].mxu0 %v746
        %v1076 = vpop.f32.mrb[0].mxu0
        %v1077 = vadd.f32 0.0, %v1076
        %v1078 = vpop.f32.mrb[0].mxu0
        %v1079 = vadd.f32 0.0, %v1078
        %1080 = vmatprep.mubr.f32.mxu0 0.0
        %1081 = vmatmul.mubr.f32.gmra.mrb[0].mxu0 %v749
        %v1082 = vpop.f32.mrb[0].mxu0
        %v1083 = vadd.f32 0.0, %v1082
        %v1084 = vpop.f32.mrb[0].mxu0
        %v1085 = vadd.f32 0.0, %v1084
        %1086 = vmatprep.mubr.f32.mxu0 0.0
        %1087 = vmatmul.mubr.f32.gmra.mrb[0].mxu0 %v752
        %v1088 = vpop.f32.mrb[0].mxu0
        %v1089 = vadd.f32 0.0, %v1088
        %v1090 = vpop.f32.mrb[0].mxu0
        %v1091 = vadd.f32 0.0, %v1090
        %1092 = vdwg.mxu0
        %v1093 = vmul.f32 %v821, %v529
        %v1094 = vmul.f32 %v823, %v530
        %v1095 = vmul.f32 %v827, %v531
        %v1096 = vmul.f32 %v829, %v532
        %v1097 = vmul.f32 %v833, %v529
        %v1098 = vmul.f32 %v835, %v530
        %v1099 = vmul.f32 %v839, %v531
        %v1100 = vmul.f32 %v841, %v532
        %v1101 = vmul.f32 %v845, %v529
        %v1102 = vmul.f32 %v847, %v530
        %v1103 = vmul.f32 %v851, %v531
        %v1104 = vmul.f32 %v853, %v532
        %v1105 = vmul.f32 %v857, %v529
        %v1106 = vmul.f32 %v859, %v530
        %v1107 = vmul.f32 %v863, %v531
        %v1108 = vmul.f32 %v865, %v532
        %v1109 = vadd.f32 %v1093, %v1095
        %v1110 = vrot.slane %v1109, 4
        %v1111 = vadd.f32 %v1109, %v1110
        %v1112 = vrot.slane %v1111, 2
        %v1113 = vadd.f32 %v1111, %v1112
        %v1114 = vrot.slane %v1113, 1
        %v1115 = vadd.f32 %v1113, %v1114
        %v1116 = vadd.f32 %v1094, %v1096
        %v1117 = vrot.slane %v1116, 4
        %v1118 = vadd.f32 %v1116, %v1117
        %v1119 = vrot.slane %v1118, 2
        %v1120 = vadd.f32 %v1118, %v1119
        %v1121 = vrot.slane %v1120, 1
        %v1122 = vadd.f32 %v1120, %v1121
        %v1123 = vadd.f32 %v1097, %v1099
        %v1124 = vrot.slane %v1123, 4
        %v1125 = vadd.f32 %v1123, %v1124
        %v1126 = vrot.slane %v1125, 2
        %v1127 = vadd.f32 %v1125, %v1126
        %v1128 = vrot.slane %v1127, 1
        %v1129 = vadd.f32 %v1127, %v1128
        %v1130 = vadd.f32 %v1098, %v1100
        %v1131 = vrot.slane %v1130, 4
        %v1132 = vadd.f32 %v1130, %v1131
        %v1133 = vrot.slane %v1132, 2
        %v1134 = vadd.f32 %v1132, %v1133
        %v1135 = vrot.slane %v1134, 1
        %v1136 = vadd.f32 %v1134, %v1135
        %v1137 = vadd.f32 %v1101, %v1103
        %v1138 = vrot.slane %v1137, 4
        %v1139 = vadd.f32 %v1137, %v1138
        %v1140 = vrot.slane %v1139, 2
        %v1141 = vadd.f32 %v1139, %v1140
        %v1142 = vrot.slane %v1141, 1
        %v1143 = vadd.f32 %v1141, %v1142
        %v1144 = vadd.f32 %v1102, %v1104
        %v1145 = vrot.slane %v1144, 4
        %v1146 = vadd.f32 %v1144, %v1145
        %v1147 = vrot.slane %v1146, 2
        %v1148 = vadd.f32 %v1146, %v1147
        %v1149 = vrot.slane %v1148, 1
        %v1150 = vadd.f32 %v1148, %v1149
        %v1151 = vadd.f32 %v1105, %v1107
        %v1152 = vrot.slane %v1151, 4
        %v1153 = vadd.f32 %v1151, %v1152
        %v1154 = vrot.slane %v1153, 2
        %v1155 = vadd.f32 %v1153, %v1154
        %v1156 = vrot.slane %v1155, 1
        %v1157 = vadd.f32 %v1155, %v1156
        %v1158 = vadd.f32 %v1106, %v1108
        %v1159 = vrot.slane %v1158, 4
        %v1160 = vadd.f32 %v1158, %v1159
        %v1161 = vrot.slane %v1160, 2
        %v1162 = vadd.f32 %v1160, %v1161
        %v1163 = vrot.slane %v1162, 1
        %v1164 = vadd.f32 %v1162, %v1163
        %v1165 = vmul.f32 %v934, %v627
        %v1166 = vmul.f32 %v936, %v628
        %v1167 = vmul.f32 %v940, %v629
        %v1168 = vmul.f32 %v942, %v630
        %v1169 = vmul.f32 %v946, %v627
        %v1170 = vmul.f32 %v948, %v628
        %v1171 = vmul.f32 %v952, %v629
        %v1172 = vmul.f32 %v954, %v630
        %v1173 = vmul.f32 %v958, %v627
        %v1174 = vmul.f32 %v960, %v628
        %v1175 = vmul.f32 %v964, %v629
        %v1176 = vmul.f32 %v966, %v630
        %v1177 = vmul.f32 %v970, %v627
        %v1178 = vmul.f32 %v972, %v628
        %v1179 = vmul.f32 %v976, %v629
        %v1180 = vmul.f32 %v978, %v630
        %v1181 = vadd.f32 %v1165, %v1167
        %v1182 = vrot.slane %v1181, 4
        %v1183 = vadd.f32 %v1181, %v1182
        %v1184 = vrot.slane %v1183, 2
        %v1185 = vadd.f32 %v1183, %v1184
        %v1186 = vrot.slane %v1185, 1
        %v1187 = vadd.f32 %v1185, %v1186
        %v1188 = vadd.f32 %v1166, %v1168
        %v1189 = vrot.slane %v1188, 4
        %v1190 = vadd.f32 %v1188, %v1189
        %v1191 = vrot.slane %v1190, 2
        %v1192 = vadd.f32 %v1190, %v1191
        %v1193 = vrot.slane %v1192, 1
        %v1194 = vadd.f32 %v1192, %v1193
        %v1195 = vadd.f32 %v1169, %v1171
        %v1196 = vrot.slane %v1195, 4
        %v1197 = vadd.f32 %v1195, %v1196
        %v1198 = vrot.slane %v1197, 2
        %v1199 = vadd.f32 %v1197, %v1198
        %v1200 = vrot.slane %v1199, 1
        %v1201 = vadd.f32 %v1199, %v1200
        %v1202 = vadd.f32 %v1170, %v1172
        %v1203 = vrot.slane %v1202, 4
        %v1204 = vadd.f32 %v1202, %v1203
        %v1205 = vrot.slane %v1204, 2
        %v1206 = vadd.f32 %v1204, %v1205
        %v1207 = vrot.slane %v1206, 1
        %v1208 = vadd.f32 %v1206, %v1207
        %v1209 = vadd.f32 %v1173, %v1175
        %v1210 = vrot.slane %v1209, 4
        %v1211 = vadd.f32 %v1209, %v1210
        %v1212 = vrot.slane %v1211, 2
        %v1213 = vadd.f32 %v1211, %v1212
        %v1214 = vrot.slane %v1213, 1
        %v1215 = vadd.f32 %v1213, %v1214
        %v1216 = vadd.f32 %v1174, %v1176
        %v1217 = vrot.slane %v1216, 4
        %v1218 = vadd.f32 %v1216, %v1217
        %v1219 = vrot.slane %v1218, 2
        %v1220 = vadd.f32 %v1218, %v1219
        %v1221 = vrot.slane %v1220, 1
        %v1222 = vadd.f32 %v1220, %v1221
        %v1223 = vadd.f32 %v1177, %v1179
        %v1224 = vrot.slane %v1223, 4
        %v1225 = vadd.f32 %v1223, %v1224
        %v1226 = vrot.slane %v1225, 2
        %v1227 = vadd.f32 %v1225, %v1226
        %v1228 = vrot.slane %v1227, 1
        %v1229 = vadd.f32 %v1227, %v1228
        %v1230 = vadd.f32 %v1178, %v1180
        %v1231 = vrot.slane %v1230, 4
        %v1232 = vadd.f32 %v1230, %v1231
        %v1233 = vrot.slane %v1232, 2
        %v1234 = vadd.f32 %v1232, %v1233
        %v1235 = vrot.slane %v1234, 1
        %v1236 = vadd.f32 %v1234, %v1235
        %v1237 = vmul.f32 %v1047, %v725
        %v1238 = vmul.f32 %v1049, %v726
        %v1239 = vmul.f32 %v1053, %v727
        %v1240 = vmul.f32 %v1055, %v728
        %v1241 = vmul.f32 %v1059, %v725
        %v1242 = vmul.f32 %v1061, %v726
        %v1243 = vmul.f32 %v1065, %v727
        %v1244 = vmul.f32 %v1067, %v728
        %v1245 = vmul.f32 %v1071, %v725
        %v1246 = vmul.f32 %v1073, %v726
        %v1247 = vmul.f32 %v1077, %v727
        %v1248 = vmul.f32 %v1079, %v728
        %v1249 = vmul.f32 %v1083, %v725
        %v1250 = vmul.f32 %v1085, %v726
        %v1251 = vmul.f32 %v1089, %v727
        %v1252 = vmul.f32 %v1091, %v728
        %v1253 = vadd.f32 %v1237, %v1239
        %v1254 = vrot.slane %v1253, 4
        %v1255 = vadd.f32 %v1253, %v1254
        %v1256 = vrot.slane %v1255, 2
        %v1257 = vadd.f32 %v1255, %v1256
        %v1258 = vrot.slane %v1257, 1
        %v1259 = vadd.f32 %v1257, %v1258
        %v1260 = vadd.f32 %v1238, %v1240
        %v1261 = vrot.slane %v1260, 4
        %v1262 = vadd.f32 %v1260, %v1261
        %v1263 = vrot.slane %v1262, 2
        %v1264 = vadd.f32 %v1262, %v1263
        %v1265 = vrot.slane %v1264, 1
        %v1266 = vadd.f32 %v1264, %v1265
        %v1267 = vadd.f32 %v1241, %v1243
        %v1268 = vrot.slane %v1267, 4
        %v1269 = vadd.f32 %v1267, %v1268
        %v1270 = vrot.slane %v1269, 2
        %v1271 = vadd.f32 %v1269, %v1270
        %v1272 = vrot.slane %v1271, 1
        %v1273 = vadd.f32 %v1271, %v1272
        %v1274 = vadd.f32 %v1242, %v1244
        %v1275 = vrot.slane %v1274, 4
        %v1276 = vadd.f32 %v1274, %v1275
        %v1277 = vrot.slane %v1276, 2
        %v1278 = vadd.f32 %v1276, %v1277
        %v1279 = vrot.slane %v1278, 1
        %v1280 = vadd.f32 %v1278, %v1279
        %v1281 = vadd.f32 %v1245, %v1247
        %v1282 = vrot.slane %v1281, 4
        %v1283 = vadd.f32 %v1281, %v1282
        %v1284 = vrot.slane %v1283, 2
        %v1285 = vadd.f32 %v1283, %v1284
        %v1286 = vrot.slane %v1285, 1
        %v1287 = vadd.f32 %v1285, %v1286
        %v1288 = vadd.f32 %v1246, %v1248
        %v1289 = vrot.slane %v1288, 4
        %v1290 = vadd.f32 %v1288, %v1289
        %v1291 = vrot.slane %v1290, 2
        %v1292 = vadd.f32 %v1290, %v1291
        %v1293 = vrot.slane %v1292, 1
        %v1294 = vadd.f32 %v1292, %v1293
        %v1295 = vadd.f32 %v1249, %v1251
        %v1296 = vrot.slane %v1295, 4
        %v1297 = vadd.f32 %v1295, %v1296
        %v1298 = vrot.slane %v1297, 2
        %v1299 = vadd.f32 %v1297, %v1298
        %v1300 = vrot.slane %v1299, 1
        %v1301 = vadd.f32 %v1299, %v1300
        %v1302 = vadd.f32 %v1250, %v1252
        %v1303 = vrot.slane %v1302, 4
        %v1304 = vadd.f32 %v1302, %v1303
        %v1305 = vrot.slane %v1304, 2
        %v1306 = vadd.f32 %v1304, %v1305
        %v1307 = vrot.slane %v1306, 1
        %v1308 = vadd.f32 %v1306, %v1307
        %vm1317 = vcmask 1041409
        %v1318 = vsel %vm1317, %v1129, %v1115
        %vm1319 = vcmask 1042434
        %v1320 = vsel %vm1319, %v1143, %v1318
        %vm1321 = vcmask 1043459
        %v1322 = vsel %vm1321, %v1157, %v1320
        %v1323 = vsel %vm1317, %v1136, %v1122
        %v1324 = vsel %vm1319, %v1150, %v1323
        %v1325 = vsel %vm1321, %v1164, %v1324
        %vm1336 = vcmask 1045509
        %v1337 = vsel %vm1336, %v1201, %v1187
        %vm1338 = vcmask 1046534
        %v1339 = vsel %vm1338, %v1215, %v1337
        %vm1340 = vcmask 1047559
        %v1341 = vsel %vm1340, %v1229, %v1339
        %v1342 = vsel %vm1336, %v1208, %v1194
        %v1343 = vsel %vm1338, %v1222, %v1342
        %v1344 = vsel %vm1340, %v1236, %v1343
        %v1355 = vsel %vm1317, %v1273, %v1259
        %v1356 = vsel %vm1319, %v1287, %v1355
        %v1357 = vsel %vm1321, %v1301, %v1356
        %v1358 = vsel %vm1317, %v1280, %v1266
        %v1359 = vsel %vm1319, %v1294, %v1358
        %v1360 = vsel %vm1321, %v1308, %v1359
        %vm1363 = vcmask 1043456
        %v1364 = vsel %vm1363, %v1322, %v1341
        %v1365 = vsel %vm1363, %v1325, %v1344
        %1366 = vst [vmem:[%s361] sm:$0xff] %v1364
        %1367 = vst [vmem:[%s361 + $0x8] sm:$0xff] %v1365
        %1368 = vst [vmem:[%s361 + $0x10] sm:$0xf] %v1357
        %1369 = vst [vmem:[%s361 + $0x18] sm:$0xf] %v1360
        %s1370 = smul.u32 2, %s25
        %p1371 = scmp.lt.s32.totalorder %s24, 1
        %s1372 = scalar_select %p1371, %s24, 1
        %p1373 = scmp.lt.s32.totalorder %s1370, 1
        %s1374 = scalar_select %p1373, %s1370, 1
        %s1375 = smul.addr %s1372, 4
        %s1376 = sadd.s32 %s1374, %s1375
        %s1377 = smul.addr %s1376, 8
        %s1378 = scalar_lea.vmem %s6, %s1377
        // Predicated region
        $region61: #{tpu_custom_call.1} parent=43 // pred_check
          %p1379 = pneg %p190
        $region62: #{tpu_custom_call.1} parent=43 // pred_check_branch
          %1381 = sbr.rel (%p1379) target = $region64
        $region63: #{tpu_custom_call.1} parent=43 // pred_region
          %s1382 = smul.u32 2, %s25
        $region64: #{tpu_custom_call.1} parent=43 // pred_fallthru
          _
      $region44: #{tpu_custom_call.1} parent=5 // pred_fallthru
        _
      %p1383 = scmp.le.s32.totalorder 2, %s15
      // Predicated region
      $region65: #{tpu_custom_call.1} parent=5 // pred_check
        %p1384 = pneg %p1383
      $region66: #{tpu_custom_call.1} parent=5 // pred_check_branch
        %1386 = sbr.rel (%p1384) target = $region68
      $region67: #{tpu_custom_call.1} parent=5 // pred_region
        %s1387 = ssub.s32 %s15, 2
        // Predicated region
        $region69: #{tpu_custom_call.1} parent=67 // pred_check
          %p1388 = pneg %p196
        $region70: #{tpu_custom_call.1} parent=67 // pred_check_branch
          %1390 = sbr.rel (%p1388) target = $region72
        $region71: #{tpu_custom_call.1} parent=67 // pred_region
          %s1391 = smul.u32 2, %s27
          %p1392 = scmp.lt.s32.totalorder %s26, 1
          %s1393 = scalar_select %p1392, %s26, 1
          %p1394 = scmp.lt.s32.totalorder %s1391, 1
          %s1395 = scalar_select %p1394, %s1391, 1
          %s1396 = smul.addr %s1393, 4
          %s1397 = sadd.s32 %s1395, %s1396
          %s1398 = smul.addr %s1397, 8
          %s1399 = scalar_lea.vmem %s6, %s1398
        $region72: #{tpu_custom_call.1} parent=67 // pred_fallthru
          _
      $region68: #{tpu_custom_call.1} parent=5 // pred_fallthru
        _
    $region6: #{tpu_custom_call.1} parent=1 // loop_footer
      %s19 = sadd.s32 1, %s15
    $region7: #{tpu_custom_call.1} parent=1 // loop_footer_branch
      %14 = sbr.rel target = $region3
    $region8: #{tpu_custom_call.1} parent=1 // loop_exit
      _
    %1400 = vsyncpa [#allocation3], 1
    %s1401 = scalar_lea.sflag [#allocation3], 1
    %1402 = vsyncpa %s1401, 1
    %1403 = vsyncpa [#allocation5], 1
    %1404 = vsyncpa [#allocation8], 1

</llo_original>
